<compile_context>
chip_gen: v7x
topology: tpu7x:2x2x1
jax: 0.10.0
libtpu: 0.0.40
codegen_flags: <defaults>
</compile_context>

<pallas_src>
import jax
import jax.numpy as jnp
from jax import lax
from jax.experimental import pallas as pl
from jax.experimental.pallas import tpu as pltpu

LANE = 128


def _round_up(x, m=LANE):
    return ((x + m - 1) // m) * m


def _vmem_limit_bytes():
    """Chip-aware scoped-VMEM limit: ~3/4 of physical VMEM."""
    cap = 64 * 1024 * 1024                     # conservative fallback (v7x-safe)
    try:
        info = pltpu.get_tpu_info()
        cap = int(getattr(info, "vmem_capacity_bytes", cap))
    except Exception:
        pass
    return min(cap * 3 // 4, 100 * 1024 * 1024)


def _pick_batch_block(n, per_sample_bytes, fixed_bytes, budget_bytes):
    """Largest divisor of n whose working set fits; prefer >= 2 grid steps."""
    divisors = [d for d in range(1, n + 1) if n % d == 0]
    fits = [d for d in divisors if fixed_bytes + d * per_sample_bytes <= budget_bytes]
    if not fits:
        return 1
    multi = [d for d in fits if n // d >= 2]    # keep both megacore TCs busy
    return max(multi) if multi else max(fits)


def _make_kernel(B, H, W, Cin, Cmid, Cout, has_conv_shortcut):
    """Kernel computes the full stride-1 block output for a batch block."""
    M = B * H * W
    bf16 = jnp.bfloat16
    f32 = jnp.float32

    def kernel(x_ref, w1_ref, b1_ref, wd_ref, b2_ref, wp_ref, bp_ref, o_ref):
        x = x_ref[...]                                   # [B, H, W, Cin] bf16
        xf = x.reshape(M, Cin)

        # ---- 1x1 expand conv (bf16 MXU, f32 acc) + folded BN + ReLU6 -------
        h1 = jnp.dot(xf, w1_ref[...], preferred_element_type=f32)
        h1 = jnp.clip(h1 + b1_ref[...], 0.0, 6.0)        # [M, Cmid] f32

        # ---- 3x3 depthwise conv (pad=1), register-resident -----------------
        # Tap (dh, dw) of the flat [M, Cmid] activation is a sublane roll by
        # dh*W + dw; border masks ([M,1] f32 columns, lane-broadcast) kill the
        # out-of-image and wraparound positions.
        wd = wd_ref[...]                                  # [9, Cmid] f32
        h_col = lax.broadcasted_iota(jnp.int32, (B, H, W, 1), 1).reshape(M, 1)
        w_col = lax.broadcasted_iota(jnp.int32, (B, H, W, 1), 2).reshape(M, 1)

        def tap_mask(dh, dw):
            conds = []
            if dh < 0:
                conds.append(h_col >= 1)
            if dh > 0:
                conds.append(h_col < H - 1)
            if dw < 0:
                conds.append(w_col >= 1)
            if dw > 0:
                conds.append(w_col < W - 1)
            if not conds:
                return None
            m = conds[0]
            for c in conds[1:]:
                m = jnp.logical_and(m, c)
            return m.astype(f32)                          # [M, 1]

        masks = {(kh - 1, kw - 1): tap_mask(kh - 1, kw - 1)
                 for kh in range(3) for kw in range(3)}

        acc = jnp.zeros((M, Cmid), f32)
        for kh in range(3):
            dh = kh - 1
            for kw in range(3):
                dw = kw - 1
                if dh == 0 and dw == 0:
                    tap = h1
                else:
                    tap = pltpu.roll(h1, shift=(-(dh * W + dw)) % M, axis=0)
                m = masks[(dh, dw)]
                if m is not None:
                    tap = tap * m                         # [M,1] lane-broadcast
                k = kh * 3 + kw
                acc = acc + tap * wd[k:k + 1, :]
        acc = jnp.clip(acc + b2_ref[...], 0.0, 6.0)       # [M, Cmid] f32

        # ---- 1x1 project conv (+ fused 1x1-conv shortcut), bf16 MXU --------
        if has_conv_shortcut:
            feat = jnp.concatenate([acc.astype(bf16), xf], axis=-1)
            out = jnp.dot(feat, wp_ref[...],
                          preferred_element_type=f32) + bp_ref[...]
        else:
            out = jnp.dot(acc.astype(bf16), wp_ref[...],
                          preferred_element_type=f32) + bp_ref[...]
            out = out + xf.astype(f32)    # identity residual (padded lanes = 0)

        o_ref[...] = out.reshape(B, H, W, Cout).astype(o_ref.dtype)

    return kernel


def linear_bottleneck(x_nchw, params, *, stride, has_conv_shortcut):
    """Forward pass of LinearBottleNeck. x_nchw: [N, Cin, H, W] float32."""
    N, Cin, H, W = x_nchw.shape
    Cmid = params['w1'].shape[1]
    Cout = params['w3'].shape[1]
    if not has_conv_shortcut:
        assert stride == 1 and Cin == Cout, (
            "identity shortcut requires stride==1 and in_channels==out_channels")

    Cin_p, Cmid_p, Cout_p = _round_up(Cin), _round_up(Cmid), _round_up(Cout)
    bf16 = jnp.bfloat16

    # NCHW -> NHWC, zero-pad channels to 128 lanes, cast activations to bf16.
    x = jnp.transpose(x_nchw, (0, 2, 3, 1))
    x = jnp.pad(x, ((0, 0), (0, 0), (0, 0), (0, Cin_p - Cin))).astype(bf16)
    # TODO(synk): for very small Cin the zero lane padding still costs HBM
    # bytes; padding inside the kernel (true-channel BlockSpec) would remove it.

    def pad2(a, rows, cols, dtype):
        a = jnp.pad(a, ((0, rows - a.shape[0]), (0, cols - a.shape[1])))
        return a.astype(dtype)

    w1 = pad2(params['w1'], Cin_p, Cmid_p, bf16)          # MXU operands -> bf16
    b1 = pad2(params['b1'], 1, Cmid_p, jnp.float32)
    wd = pad2(params['wd'], 9, Cmid_p, jnp.float32)       # VPU operand -> f32
    b2 = pad2(params['b2'], 1, Cmid_p, jnp.float32)
    w3 = pad2(params['w3'], Cmid_p, Cout_p, bf16)
    b3 = pad2(params['b3'], 1, Cout_p, jnp.float32)
    if has_conv_shortcut:
        # K-fused project + shortcut: [acc | x] @ [[w3],[wsc]] + (b3 + bsc)
        wsc = pad2(params['wsc'], Cin_p, Cout_p, bf16)
        bsc = pad2(params['bsc'], 1, Cout_p, jnp.float32)
        wp = jnp.concatenate([w3, wsc], axis=0)
        bp = b3 + bsc
        Kp = Cmid_p + Cin_p
    else:
        wp, bp, Kp = w3, b3, Cmid_p

    # VMEM-aware batch-block choice (>= 2 grid steps preferred for megacore).
    vmem_limit = _vmem_limit_bytes()
    per_sample = (
        2 * H * W * Cin_p * 2                 # x block, 2 pipeline buffers, bf16
        + 2 * H * W * Cout_p * 4              # out block, 2 pipeline buffers, f32
        + 4 * H * W * Cmid_p * 4              # h1 + rolled/masked tap + acc, f32
        + H * W * Kp * 2                      # fused-matmul lhs, bf16
        + H * W * 4 * 4)                      # mask/iota columns, slack
    fixed = 2 * ((Cin_p * Cmid_p + Kp * Cout_p) * 2
                 + (9 + 2) * Cmid_p * 4 + Cout_p * 4)
    B = _pick_batch_block(N, per_sample, fixed, int(vmem_limit * 0.8))

    kernel = _make_kernel(B, H, W, Cin_p, Cmid_p, Cout_p, has_conv_shortcut)

    ins = [x, w1, b1, wd, b2, wp, bp]
    in_specs = [
        pl.BlockSpec((B, H, W, Cin_p), lambda n: (n, 0, 0, 0)),
        pl.BlockSpec((Cin_p, Cmid_p), lambda n: (0, 0)),
        pl.BlockSpec((1, Cmid_p), lambda n: (0, 0)),
        pl.BlockSpec((9, Cmid_p), lambda n: (0, 0)),
        pl.BlockSpec((1, Cmid_p), lambda n: (0, 0)),
        pl.BlockSpec((Kp, Cout_p), lambda n: (0, 0)),
        pl.BlockSpec((1, Cout_p), lambda n: (0, 0)),
    ]

    out_nhwc = pl.pallas_call(
        kernel,
        out_shape=jax.ShapeDtypeStruct((N, H, W, Cout_p), jnp.float32),
        grid_spec=pltpu.PrefetchScalarGridSpec(
            num_scalar_prefetch=0,
            grid=(N // B,),
            in_specs=in_specs,
            out_specs=pl.BlockSpec((B, H, W, Cout_p), lambda n: (n, 0, 0, 0)),
        ),
        compiler_params=pltpu.CompilerParams(
            dimension_semantics=("parallel",),
            vmem_limit_bytes=int(vmem_limit)),
    )(*ins)

    # stride subsample (1x1 convs are per-pixel so this commutes), strip
    # channel padding, back to NCHW.
    out_nhwc = out_nhwc[:, ::stride, ::stride, :Cout]
    return jnp.transpose(out_nhwc, (0, 3, 1, 2))


def init_params(key, Cin, Cout, t, has_conv_shortcut, eps=1e-5):
    """Deterministic params with eval-mode BN folded into the convs."""
    Cmid = Cin * t
    keys = iter(jax.random.split(key, 32))

    def bn(C):
        gamma = 1.0 + 0.1 * jax.random.normal(next(keys), (C,), jnp.float32)
        beta = 0.1 * jax.random.normal(next(keys), (C,), jnp.float32)
        mean = 0.1 * jax.random.normal(next(keys), (C,), jnp.float32)
        var = 1.0 + 0.5 * jax.random.uniform(next(keys), (C,), jnp.float32)
        scale = gamma / jnp.sqrt(var + eps)
        shift = beta - mean * scale
        return scale, shift

    p = {}
    # expand 1x1 conv: torch weight [Cmid, Cin, 1, 1] -> [Cin, Cmid]
    w1 = 0.3 * jax.random.normal(next(keys), (Cin, Cmid), jnp.float32)
    b1 = 0.1 * jax.random.normal(next(keys), (Cmid,), jnp.float32)
    s, sh = bn(Cmid)
    p['w1'] = w1 * s[None, :]
    p['b1'] = (b1 * s + sh)[None, :]
    # depthwise 3x3 conv: torch weight [Cmid, 1, 3, 3] -> [9, Cmid]
    wd = 0.3 * jax.random.normal(next(keys), (3, 3, Cmid), jnp.float32)
    b2 = 0.1 * jax.random.normal(next(keys), (Cmid,), jnp.float32)
    s, sh = bn(Cmid)
    p['wd'] = (wd * s[None, None, :]).reshape(9, Cmid)
    p['b2'] = (b2 * s + sh)[None, :]
    # project 1x1 conv: torch weight [Cout, Cmid, 1, 1] -> [Cmid, Cout]
    w3 = 0.3 * jax.random.normal(next(keys), (Cmid, Cout), jnp.float32)
    b3 = 0.1 * jax.random.normal(next(keys), (Cout,), jnp.float32)
    s, sh = bn(Cout)
    p['w3'] = w3 * s[None, :]
    p['b3'] = (b3 * s + sh)[None, :]
    if has_conv_shortcut:
        wsc = 0.3 * jax.random.normal(next(keys), (Cin, Cout), jnp.float32)
        bsc = 0.1 * jax.random.normal(next(keys), (Cout,), jnp.float32)
        s, sh = bn(Cout)
        p['wsc'] = wsc * s[None, :]
        p['bsc'] = (bsc * s + sh)[None, :]
    return p


def reference_nhwc(x, p, *, stride, has_conv_shortcut):
    """Pure-JAX reference of the same math (NHWC, bf16-operand matmuls)."""
    bf = jnp.bfloat16
    N, H, W, Cin = x.shape
    Cmid = p['w1'].shape[1]
    Ho = (H + 2 - 3) // stride + 1
    Wo = (W + 2 - 3) // stride + 1
    xb = x.astype(bf)                      # activations stored in HBM as bf16
    h1 = jnp.einsum('nhwc,cm->nhwm', xb, p['w1'].astype(bf),
                    preferred_element_type=jnp.float32) + p['b1'][0]
    h1 = jnp.clip(h1, 0.0, 6.0)
    h1p = jnp.pad(h1, ((0, 0), (1, 1), (1, 1), (0, 0)))
    wd = p['wd'].reshape(3, 3, Cmid)
    acc = jnp.zeros((N, Ho, Wo, Cmid), jnp.float32)
    for kh in range(3):
        for kw in range(3):
            tap = h1p[:, kh::stride, kw::stride, :][:, :Ho, :Wo, :]
            acc = acc + tap * wd[kh, kw][None, None, None, :]
    h2 = jnp.clip(acc + p['b2'][0], 0.0, 6.0)
    out = jnp.einsum('nhwm,mo->nhwo', h2.astype(bf), p['w3'].astype(bf),
                     preferred_element_type=jnp.float32) + p['b3'][0]
    if has_conv_shortcut:
        xs = xb[:, ::stride, ::stride, :][:, :Ho, :Wo, :]
        sc = jnp.einsum('nhwc,co->nhwo', xs, p['wsc'].astype(bf),
                        preferred_element_type=jnp.float32) + p['bsc'][0]
    else:
        sc = xb.astype(jnp.float32)
    return out + sc


if __name__ == "__main__":
    key = jax.random.PRNGKey(0)
    kx, kp1, kp2, kp3 = jax.random.split(key, 4)

    N, Cin, H, W, t = 2, 4, 16, 16, 6
    x = jax.random.normal(kx, (N, Cin, H, W), jnp.float32)
    x_nhwc = jnp.transpose(x, (0, 2, 3, 1))

    # Config A: stride=1, in_channels == out_channels -> identity shortcut
    params_a = init_params(kp1, Cin, Cin, t, has_conv_shortcut=False)
    y_a = linear_bottleneck(x, params_a, stride=1, has_conv_shortcut=False)
    jax.block_until_ready(y_a)
    ref_a = jnp.transpose(
        reference_nhwc(x_nhwc, params_a, stride=1, has_conv_shortcut=False),
        (0, 3, 1, 2))
    assert y_a.shape == (N, Cin, H, W)
    assert jnp.allclose(y_a, ref_a, atol=5e-2, rtol=5e-2), \
        float(jnp.max(jnp.abs(y_a - ref_a)))

    # Config B: stride=1, in_channels != out_channels -> 1x1 conv + BN shortcut
    Cout = 8
    params_b = init_params(kp2, Cin, Cout, t, has_conv_shortcut=True)
    y_b = linear_bottleneck(x, params_b, stride=1, has_conv_shortcut=True)
    jax.block_until_ready(y_b)
    ref_b = jnp.transpose(
        reference_nhwc(x_nhwc, params_b, stride=1, has_conv_shortcut=True),
        (0, 3, 1, 2))
    assert y_b.shape == (N, Cout, H, W)
    assert jnp.allclose(y_b, ref_b, atol=5e-2, rtol=5e-2), \
        float(jnp.max(jnp.abs(y_b - ref_b)))

    # Config C: stride=2 -> 1x1 conv + BN shortcut, spatial downsample
    params_c = init_params(kp3, Cin, Cout, t, has_conv_shortcut=True)
    y_c = linear_bottleneck(x, params_c, stride=2, has_conv_shortcut=True)
    jax.block_until_ready(y_c)
    ref_c = jnp.transpose(
        reference_nhwc(x_nhwc, params_c, stride=2, has_conv_shortcut=True),
        (0, 3, 1, 2))
    assert y_c.shape == (N, Cout, H // 2, W // 2)
    assert jnp.allclose(y_c, ref_c, atol=5e-2, rtol=5e-2), \
        float(jnp.max(jnp.abs(y_c - ref_c)))

    print("KERNEL_OK")
</pallas_src>

<mosaic_0001>
module attributes {stable_mosaic.version = 11 : i64} {
  func.func @kernel(%arg0: i32, %arg1: memref<1x16x16x128xbf16, #tpu.memory_space<vmem>>, %arg2: memref<128x128xbf16, #tpu.memory_space<vmem>>, %arg3: memref<1x128xf32, #tpu.memory_space<vmem>>, %arg4: memref<9x128xf32, #tpu.memory_space<vmem>>, %arg5: memref<1x128xf32, #tpu.memory_space<vmem>>, %arg6: memref<128x128xbf16, #tpu.memory_space<vmem>>, %arg7: memref<1x128xf32, #tpu.memory_space<vmem>>, %arg8: memref<1x16x16x128xf32, #tpu.memory_space<vmem>>) attributes {dimension_semantics = [#tpu.dimension_semantics<parallel>], iteration_bounds = array<i64: 2>, scalar_prefetch = 0 : i64, scratch_operands = 0 : i64, tpu.core_type = #tpu.core_type<tc>, window_params = [{transform_indices = @transform_0, window_bounds = array<i64: 1, 16, 16, 128>}, {pipeline_mode = #tpu.pipeline_mode<synchronous>, transform_indices = @transform_1, window_bounds = array<i64: 128, 128>}, {pipeline_mode = #tpu.pipeline_mode<synchronous>, transform_indices = @transform_2, window_bounds = array<i64: 1, 128>}, {pipeline_mode = #tpu.pipeline_mode<synchronous>, transform_indices = @transform_3, window_bounds = array<i64: 9, 128>}, {pipeline_mode = #tpu.pipeline_mode<synchronous>, transform_indices = @transform_4, window_bounds = array<i64: 1, 128>}, {pipeline_mode = #tpu.pipeline_mode<synchronous>, transform_indices = @transform_5, window_bounds = array<i64: 128, 128>}, {pipeline_mode = #tpu.pipeline_mode<synchronous>, transform_indices = @transform_6, window_bounds = array<i64: 1, 128>}, {transform_indices = @transform_7, window_bounds = array<i64: 1, 16, 16, 128>}]} {
    %c0 = arith.constant 0 : index
    %c0_0 = arith.constant 0 : index
    %c0_1 = arith.constant 0 : index
    %c0_2 = arith.constant 0 : index
    %0 = vector.load %arg1[%c0, %c0_0, %c0_1, %c0_2] : memref<1x16x16x128xbf16, #tpu.memory_space<vmem>>, vector<1x16x16x128xbf16>
    %1 = vector.shape_cast %0 : vector<1x16x16x128xbf16> to vector<256x128xbf16>
    %c0_3 = arith.constant 0 : index
    %c0_4 = arith.constant 0 : index
    %2 = vector.load %arg2[%c0_3, %c0_4] : memref<128x128xbf16, #tpu.memory_space<vmem>>, vector<128x128xbf16>
    %cst = arith.constant dense<0.000000e+00> : vector<256x128xf32>
    %3 = tpu.matmul %1, %2, %cst {dimension_numbers = #tpu.dot_dimension_numbers<[1], [0], [0], [1], [0, 0, 1, 1], [], []>} : vector<256x128xbf16>, vector<128x128xbf16>, vector<256x128xf32> -> vector<256x128xf32>
    %c0_5 = arith.constant 0 : index
    %c0_6 = arith.constant 0 : index
    %4 = vector.load %arg3[%c0_5, %c0_6] : memref<1x128xf32, #tpu.memory_space<vmem>>, vector<1x128xf32>
    %5 = vector.broadcast %4 : vector<1x128xf32> to vector<256x128xf32>
    %6 = arith.addf %3, %5 : vector<256x128xf32>
    %cst_7 = arith.constant 0.000000e+00 : f32
    %cst_8 = arith.constant 6.000000e+00 : f32
    %7 = vector.broadcast %cst_7 : f32 to vector<256x128xf32>
    %8 = arith.maximumf %7, %6 : vector<256x128xf32>
    %9 = vector.broadcast %cst_8 : f32 to vector<256x128xf32>
    %10 = arith.minimumf %9, %8 : vector<256x128xf32>
    %c0_9 = arith.constant 0 : index
    %c0_10 = arith.constant 0 : index
    %11 = vector.load %arg4[%c0_9, %c0_10] : memref<9x128xf32, #tpu.memory_space<vmem>>, vector<9x128xf32>
    %12 = tpu.iota {dimensions = array<i32: 1>} : vector<1x16x16x1xi32>
    %13 = vector.shape_cast %12 : vector<1x16x16x1xi32> to vector<256x1xi32>
    %14 = tpu.iota {dimensions = array<i32: 2>} : vector<1x16x16x1xi32>
    %15 = vector.shape_cast %14 : vector<1x16x16x1xi32> to vector<256x1xi32>
    %c1_i32 = arith.constant 1 : i32
    %16 = vector.broadcast %c1_i32 : i32 to vector<256x1xi32>
    %17 = arith.cmpi sge, %13, %16 : vector<256x1xi32>
    %c1_i32_11 = arith.constant 1 : i32
    %18 = vector.broadcast %c1_i32_11 : i32 to vector<256x1xi32>
    %19 = arith.cmpi sge, %15, %18 : vector<256x1xi32>
    %20 = arith.andi %17, %19 : vector<256x1xi1>
    %21 = arith.extui %20 : vector<256x1xi1> to vector<256x1xi32>
    %22 = arith.sitofp %21 : vector<256x1xi32> to vector<256x1xf32>
    %c1_i32_12 = arith.constant 1 : i32
    %23 = vector.broadcast %c1_i32_12 : i32 to vector<256x1xi32>
    %24 = arith.cmpi sge, %13, %23 : vector<256x1xi32>
    %25 = arith.extui %24 : vector<256x1xi1> to vector<256x1xi32>
    %26 = arith.sitofp %25 : vector<256x1xi32> to vector<256x1xf32>
    %c1_i32_13 = arith.constant 1 : i32
    %27 = vector.broadcast %c1_i32_13 : i32 to vector<256x1xi32>
    %28 = arith.cmpi sge, %13, %27 : vector<256x1xi32>
    %c15_i32 = arith.constant 15 : i32
    %29 = vector.broadcast %c15_i32 : i32 to vector<256x1xi32>
    %30 = arith.cmpi slt, %15, %29 : vector<256x1xi32>
    %31 = arith.andi %28, %30 : vector<256x1xi1>
    %32 = arith.extui %31 : vector<256x1xi1> to vector<256x1xi32>
    %33 = arith.sitofp %32 : vector<256x1xi32> to vector<256x1xf32>
    %c1_i32_14 = arith.constant 1 : i32
    %34 = vector.broadcast %c1_i32_14 : i32 to vector<256x1xi32>
    %35 = arith.cmpi sge, %15, %34 : vector<256x1xi32>
    %36 = arith.extui %35 : vector<256x1xi1> to vector<256x1xi32>
    %37 = arith.sitofp %36 : vector<256x1xi32> to vector<256x1xf32>
    %c15_i32_15 = arith.constant 15 : i32
    %38 = vector.broadcast %c15_i32_15 : i32 to vector<256x1xi32>
    %39 = arith.cmpi slt, %15, %38 : vector<256x1xi32>
    %40 = arith.extui %39 : vector<256x1xi1> to vector<256x1xi32>
    %41 = arith.sitofp %40 : vector<256x1xi32> to vector<256x1xf32>
    %c15_i32_16 = arith.constant 15 : i32
    %42 = vector.broadcast %c15_i32_16 : i32 to vector<256x1xi32>
    %43 = arith.cmpi slt, %13, %42 : vector<256x1xi32>
    %c1_i32_17 = arith.constant 1 : i32
    %44 = vector.broadcast %c1_i32_17 : i32 to vector<256x1xi32>
    %45 = arith.cmpi sge, %15, %44 : vector<256x1xi32>
    %46 = arith.andi %43, %45 : vector<256x1xi1>
    %47 = arith.extui %46 : vector<256x1xi1> to vector<256x1xi32>
    %48 = arith.sitofp %47 : vector<256x1xi32> to vector<256x1xf32>
    %c15_i32_18 = arith.constant 15 : i32
    %49 = vector.broadcast %c15_i32_18 : i32 to vector<256x1xi32>
    %50 = arith.cmpi slt, %13, %49 : vector<256x1xi32>
    %51 = arith.extui %50 : vector<256x1xi1> to vector<256x1xi32>
    %52 = arith.sitofp %51 : vector<256x1xi32> to vector<256x1xf32>
    %c15_i32_19 = arith.constant 15 : i32
    %53 = vector.broadcast %c15_i32_19 : i32 to vector<256x1xi32>
    %54 = arith.cmpi slt, %13, %53 : vector<256x1xi32>
    %c15_i32_20 = arith.constant 15 : i32
    %55 = vector.broadcast %c15_i32_20 : i32 to vector<256x1xi32>
    %56 = arith.cmpi slt, %15, %55 : vector<256x1xi32>
    %57 = arith.andi %54, %56 : vector<256x1xi1>
    %58 = arith.extui %57 : vector<256x1xi1> to vector<256x1xi32>
    %59 = arith.sitofp %58 : vector<256x1xi32> to vector<256x1xf32>
    %cst_21 = arith.constant 0.000000e+00 : f32
    %60 = vector.broadcast %cst_21 : f32 to vector<256x128xf32>
    %c17_i32 = arith.constant 17 : i32
    %61 = tpu.dynamic_rotate %10 by %c17_i32 dim 0 : vector<256x128xf32>, i32 -> vector<256x128xf32>
    %62 = vector.broadcast %22 : vector<256x1xf32> to vector<256x128xf32>
    %63 = arith.mulf %61, %62 : vector<256x128xf32>
    %64 = vector.extract_strided_slice %11 {offsets = [0, 0], sizes = [1, 128], strides = [1, 1]} : vector<9x128xf32> to vector<1x128xf32>
    %65 = vector.broadcast %64 : vector<1x128xf32> to vector<256x128xf32>
    %66 = arith.mulf %63, %65 : vector<256x128xf32>
    %67 = arith.addf %60, %66 : vector<256x128xf32>
    %c16_i32 = arith.constant 16 : i32
    %68 = tpu.dynamic_rotate %10 by %c16_i32 dim 0 : vector<256x128xf32>, i32 -> vector<256x128xf32>
    %69 = vector.broadcast %26 : vector<256x1xf32> to vector<256x128xf32>
    %70 = arith.mulf %68, %69 : vector<256x128xf32>
    %71 = vector.extract_strided_slice %11 {offsets = [1, 0], sizes = [1, 128], strides = [1, 1]} : vector<9x128xf32> to vector<1x128xf32>
    %72 = vector.broadcast %71 : vector<1x128xf32> to vector<256x128xf32>
    %73 = arith.mulf %70, %72 : vector<256x128xf32>
    %74 = arith.addf %67, %73 : vector<256x128xf32>
    %c15_i32_22 = arith.constant 15 : i32
    %75 = tpu.dynamic_rotate %10 by %c15_i32_22 dim 0 : vector<256x128xf32>, i32 -> vector<256x128xf32>
    %76 = vector.broadcast %33 : vector<256x1xf32> to vector<256x128xf32>
    %77 = arith.mulf %75, %76 : vector<256x128xf32>
    %78 = vector.extract_strided_slice %11 {offsets = [2, 0], sizes = [1, 128], strides = [1, 1]} : vector<9x128xf32> to vector<1x128xf32>
    %79 = vector.broadcast %78 : vector<1x128xf32> to vector<256x128xf32>
    %80 = arith.mulf %77, %79 : vector<256x128xf32>
    %81 = arith.addf %74, %80 : vector<256x128xf32>
    %c1_i32_23 = arith.constant 1 : i32
    %82 = tpu.dynamic_rotate %10 by %c1_i32_23 dim 0 : vector<256x128xf32>, i32 -> vector<256x128xf32>
    %83 = vector.broadcast %37 : vector<256x1xf32> to vector<256x128xf32>
    %84 = arith.mulf %82, %83 : vector<256x128xf32>
    %85 = vector.extract_strided_slice %11 {offsets = [3, 0], sizes = [1, 128], strides = [1, 1]} : vector<9x128xf32> to vector<1x128xf32>
    %86 = vector.broadcast %85 : vector<1x128xf32> to vector<256x128xf32>
    %87 = arith.mulf %84, %86 : vector<256x128xf32>
    %88 = arith.addf %81, %87 : vector<256x128xf32>
    %89 = vector.extract_strided_slice %11 {offsets = [4, 0], sizes = [1, 128], strides = [1, 1]} : vector<9x128xf32> to vector<1x128xf32>
    %90 = vector.broadcast %89 : vector<1x128xf32> to vector<256x128xf32>
    %91 = arith.mulf %10, %90 : vector<256x128xf32>
    %92 = arith.addf %88, %91 : vector<256x128xf32>
    %c255_i32 = arith.constant 255 : i32
    %93 = tpu.dynamic_rotate %10 by %c255_i32 dim 0 : vector<256x128xf32>, i32 -> vector<256x128xf32>
    %94 = vector.broadcast %41 : vector<256x1xf32> to vector<256x128xf32>
    %95 = arith.mulf %93, %94 : vector<256x128xf32>
    %96 = vector.extract_strided_slice %11 {offsets = [5, 0], sizes = [1, 128], strides = [1, 1]} : vector<9x128xf32> to vector<1x128xf32>
    %97 = vector.broadcast %96 : vector<1x128xf32> to vector<256x128xf32>
    %98 = arith.mulf %95, %97 : vector<256x128xf32>
    %99 = arith.addf %92, %98 : vector<256x128xf32>
    %c241_i32 = arith.constant 241 : i32
    %100 = tpu.dynamic_rotate %10 by %c241_i32 dim 0 : vector<256x128xf32>, i32 -> vector<256x128xf32>
    %101 = vector.broadcast %48 : vector<256x1xf32> to vector<256x128xf32>
    %102 = arith.mulf %100, %101 : vector<256x128xf32>
    %103 = vector.extract_strided_slice %11 {offsets = [6, 0], sizes = [1, 128], strides = [1, 1]} : vector<9x128xf32> to vector<1x128xf32>
    %104 = vector.broadcast %103 : vector<1x128xf32> to vector<256x128xf32>
    %105 = arith.mulf %102, %104 : vector<256x128xf32>
    %106 = arith.addf %99, %105 : vector<256x128xf32>
    %c240_i32 = arith.constant 240 : i32
    %107 = tpu.dynamic_rotate %10 by %c240_i32 dim 0 : vector<256x128xf32>, i32 -> vector<256x128xf32>
    %108 = vector.broadcast %52 : vector<256x1xf32> to vector<256x128xf32>
    %109 = arith.mulf %107, %108 : vector<256x128xf32>
    %110 = vector.extract_strided_slice %11 {offsets = [7, 0], sizes = [1, 128], strides = [1, 1]} : vector<9x128xf32> to vector<1x128xf32>
    %111 = vector.broadcast %110 : vector<1x128xf32> to vector<256x128xf32>
    %112 = arith.mulf %109, %111 : vector<256x128xf32>
    %113 = arith.addf %106, %112 : vector<256x128xf32>
    %c239_i32 = arith.constant 239 : i32
    %114 = tpu.dynamic_rotate %10 by %c239_i32 dim 0 : vector<256x128xf32>, i32 -> vector<256x128xf32>
    %115 = vector.broadcast %59 : vector<256x1xf32> to vector<256x128xf32>
    %116 = arith.mulf %114, %115 : vector<256x128xf32>
    %117 = vector.extract_strided_slice %11 {offsets = [8, 0], sizes = [1, 128], strides = [1, 1]} : vector<9x128xf32> to vector<1x128xf32>
    %118 = vector.broadcast %117 : vector<1x128xf32> to vector<256x128xf32>
    %119 = arith.mulf %116, %118 : vector<256x128xf32>
    %120 = arith.addf %113, %119 : vector<256x128xf32>
    %c0_24 = arith.constant 0 : index
    %c0_25 = arith.constant 0 : index
    %121 = vector.load %arg5[%c0_24, %c0_25] : memref<1x128xf32, #tpu.memory_space<vmem>>, vector<1x128xf32>
    %122 = vector.broadcast %121 : vector<1x128xf32> to vector<256x128xf32>
    %123 = arith.addf %120, %122 : vector<256x128xf32>
    %cst_26 = arith.constant 0.000000e+00 : f32
    %cst_27 = arith.constant 6.000000e+00 : f32
    %124 = vector.broadcast %cst_26 : f32 to vector<256x128xf32>
    %125 = arith.maximumf %124, %123 : vector<256x128xf32>
    %126 = vector.broadcast %cst_27 : f32 to vector<256x128xf32>
    %127 = arith.minimumf %126, %125 : vector<256x128xf32>
    %128 = arith.truncf %127 : vector<256x128xf32> to vector<256x128xbf16>
    %c0_28 = arith.constant 0 : index
    %c0_29 = arith.constant 0 : index
    %129 = vector.load %arg6[%c0_28, %c0_29] : memref<128x128xbf16, #tpu.memory_space<vmem>>, vector<128x128xbf16>
    %cst_30 = arith.constant dense<0.000000e+00> : vector<256x128xf32>
    %130 = tpu.matmul %128, %129, %cst_30 {dimension_numbers = #tpu.dot_dimension_numbers<[1], [0], [0], [1], [0, 0, 1, 1], [], []>} : vector<256x128xbf16>, vector<128x128xbf16>, vector<256x128xf32> -> vector<256x128xf32>
    %c0_31 = arith.constant 0 : index
    %c0_32 = arith.constant 0 : index
    %131 = vector.load %arg7[%c0_31, %c0_32] : memref<1x128xf32, #tpu.memory_space<vmem>>, vector<1x128xf32>
    %132 = vector.broadcast %131 : vector<1x128xf32> to vector<256x128xf32>
    %133 = arith.addf %130, %132 : vector<256x128xf32>
    %134 = arith.extf %1 : vector<256x128xbf16> to vector<256x128xf32>
    %135 = arith.addf %133, %134 : vector<256x128xf32>
    %136 = vector.shape_cast %135 : vector<256x128xf32> to vector<1x16x16x128xf32>
    %c0_33 = arith.constant 0 : index
    %c0_34 = arith.constant 0 : index
    %c0_35 = arith.constant 0 : index
    %c0_36 = arith.constant 0 : index
    %137 = vector.load %arg8[%c0_33, %c0_34, %c0_35, %c0_36] : memref<1x16x16x128xf32, #tpu.memory_space<vmem>>, vector<1x16x16x128xf32>
    tpu.vector_store %arg8[%c0_33, %c0_34, %c0_35, %c0_36], %136 {strides = array<i32>} : memref<1x16x16x128xf32, #tpu.memory_space<vmem>>, vector<1x16x16x128xf32>,
    return
  }
  func.func @transform_0(%arg0: i32) -> (i32, i32, i32, i32) {
    %c0_i32 = arith.constant 0 : i32
    %c0_i32_0 = arith.constant 0 : i32
    %c0_i32_1 = arith.constant 0 : i32
    %c0_i32_2 = arith.constant 0 : i32
    return %arg0, %c0_i32, %c0_i32_0, %c0_i32_1 : i32, i32, i32, i32
  }
  func.func @transform_1(%arg0: i32) -> (i32, i32) {
    %c0_i32 = arith.constant 0 : i32
    %c0_i32_0 = arith.constant 0 : i32
    %c0_i32_1 = arith.constant 0 : i32
    return %c0_i32, %c0_i32_0 : i32, i32
  }
  func.func @transform_2(%arg0: i32) -> (i32, i32) {
    %c0_i32 = arith.constant 0 : i32
    %c0_i32_0 = arith.constant 0 : i32
    %c0_i32_1 = arith.constant 0 : i32
    return %c0_i32, %c0_i32_0 : i32, i32
  }
  func.func @transform_3(%arg0: i32) -> (i32, i32) {
    %c0_i32 = arith.constant 0 : i32
    %c0_i32_0 = arith.constant 0 : i32
    %c0_i32_1 = arith.constant 0 : i32
    return %c0_i32, %c0_i32_0 : i32, i32
  }
  func.func @transform_4(%arg0: i32) -> (i32, i32) {
    %c0_i32 = arith.constant 0 : i32
    %c0_i32_0 = arith.constant 0 : i32
    %c0_i32_1 = arith.constant 0 : i32
    return %c0_i32, %c0_i32_0 : i32, i32
  }
  func.func @transform_5(%arg0: i32) -> (i32, i32) {
    %c0_i32 = arith.constant 0 : i32
    %c0_i32_0 = arith.constant 0 : i32
    %c0_i32_1 = arith.constant 0 : i32
    return %c0_i32, %c0_i32_0 : i32, i32
  }
  func.func @transform_6(%arg0: i32) -> (i32, i32) {
    %c0_i32 = arith.constant 0 : i32
    %c0_i32_0 = arith.constant 0 : i32
    %c0_i32_1 = arith.constant 0 : i32
    return %c0_i32, %c0_i32_0 : i32, i32
  }
  func.func @transform_7(%arg0: i32) -> (i32, i32, i32, i32) {
    %c0_i32 = arith.constant 0 : i32
    %c0_i32_0 = arith.constant 0 : i32
    %c0_i32_1 = arith.constant 0 : i32
    %c0_i32_2 = arith.constant 0 : i32
    return %arg0, %c0_i32, %c0_i32_0, %c0_i32_1 : i32, i32, i32, i32
  }
}

</mosaic_0001>

<llo_original>
// kernel: tpu_custom_call.1
$region0: #{tpu_custom_call.1}
  #allocation0 [shape = 'u32[]', space=smem, size = 0x4, offset = 0x4, fixed_abs, tag = 'smem constant byte address 0x4 - core index']
  #allocation1 [shape = 'u32[144,128]{1,0:T(1,128)}', space=vmem, size = 0x12000, scoped, tag = 'internal scratch']
  %s0 = inlined_call_operand.hbm [shape: bf16[2,16,16,128], index: 0, kind: input, shape index: {}]
  %s1 = inlined_call_operand.hbm [shape: bf16[128,128], index: 1, kind: input, shape index: {}]
  %s2 = inlined_call_operand.vmem [shape: f32[1,128], index: 2, kind: input, shape index: {}]
  %s3 = inlined_call_operand.hbm [shape: f32[9,128], index: 3, kind: input, shape index: {}]
  %s4 = inlined_call_operand.vmem [shape: f32[1,128], index: 4, kind: input, shape index: {}]
  %s5 = inlined_call_operand.hbm [shape: bf16[128,128], index: 5, kind: input, shape index: {}]
  %s6 = inlined_call_operand.vmem [shape: f32[1,128], index: 6, kind: input, shape index: {}]
  %s7 = inlined_call_operand.hbm [shape: f32[2,16,16,128], index: 7, kind: output, shape index: {}]
  %s8 = sld [smem:[#allocation0]]
  $region77: #{tpu_custom_call.1} parent=0
    _
  %s10 = ssub.s32 1, %s8
  %s11 = scalar_select 0, %s10, %s8
  $region1: #{tpu_custom_call.1} parent=0
    #allocation2 [shape = 'u8[131072]{0}', space=vmem, size = 0x20000, scoped, tag = 'input window, operand 0']
    #allocation3 [shape = 's32[2]{0}', space=sflag, size = 0x8, scoped, tag = 'scoped memory for tpu_custom_call.1']
    #allocation4 [shape = 's32[2]{0}', space=sflag, size = 0x8, scoped, tag = 'scoped memory for tpu_custom_call.1']
    #allocation5 [shape = 'u8[32768]{0}', space=vmem, size = 0x8000, scoped, tag = 'input window, operand 1, single buffered']
    #allocation6 [shape = 's32[1]{0}', space=sflag, size = 0x4, scoped, tag = 'scoped memory for tpu_custom_call.1']
    #allocation7 [shape = 'u8[8192]{0}', space=vmem, size = 0x2000, scoped, tag = 'input window, operand 3, single buffered']
    #allocation8 [shape = 'u8[32768]{0}', space=vmem, size = 0x8000, scoped, tag = 'input window, operand 5, single buffered']
    #allocation9 [shape = 's32[1]{0}', space=sflag, size = 0x4, scoped, tag = 'scoped memory for tpu_custom_call.1']
    #allocation10 [shape = 'u8[262144]{0}', space=vmem, size = 0x40000, scoped, tag = 'output window, operand 0']
    %12 = vsyncpa [#allocation3], 0
    %s13 = scalar_lea.sflag [#allocation3], 1
    %14 = vsyncpa %s13, 0
    %15 = vsyncpa [#allocation6], 0
    %16 = vsyncpa [#allocation9], 0
    %17 = vsyncpa [#allocation4], 0
    %s18 = scalar_lea.sflag [#allocation4], 1
    %19 = vsyncpa %s18, 0
    loop: start=0, step=1, limit=4
    $region2: #{tpu_custom_call.1} parent=1 // loop_pre_header
      _
    $region3: #{tpu_custom_call.1} parent=1 // loop_header
      %s21 = sphi 0, %s25
      %p22 = scmp.ge.s32.totalorder %s21, 4
      %s31 = sphi 0, %s33
      %s34 = sphi 0, %s31
      %s35 = sphi 0, %s34
      %s51 = sphi 0, %s35
      %s55 = sphi 0, %s55
      %s57 = sphi 0, %s55
      %s58 = sphi 0, %s57
      %s72 = sphi 0, %s58
      %s76 = sphi 0, %s76
      %s78 = sphi 0, %s76
      %s79 = sphi 0, %s78
      %s93 = sphi 0, %s79
      %s97 = sphi 0, %s97
      %s99 = sphi 0, %s97
      %s100 = sphi 0, %s99
      %s114 = sphi 0, %s100
      %s118 = sphi 0, %s118
      %s120 = sphi 0, %s118
      %s121 = sphi 0, %s120
      %s135 = sphi 0, %s121
      %s139 = sphi 0, %s139
      %s141 = sphi 0, %s139
      %s142 = sphi 0, %s141
      %s156 = sphi 0, %s142
      %s160 = sphi 0, %s160
      %s162 = sphi 0, %s160
      %s163 = sphi 0, %s162
      %s177 = sphi 0, %s163
      %s183 = sphi 0, %s185
      %s186 = sphi 0, %s183
      %s187 = sphi 0, %s186
      %s203 = sphi 0, %s187
    $region4: #{tpu_custom_call.1} parent=1 // loop_header_branch
      %24 = sbr.rel (%p22) target = $region8
    $region5: #{tpu_custom_call.1} parent=1 // loop_body
      %s26 = ssub.s32 %s21, 1
      %s27 = ssub.s32 %s21, 2
      %s28 = sadd.s32 %s21, 1
      %s29 = ssub.s32 %s21, %s28
      %p30 = scmp.eq.s32.totalorder %s29, 0
      %s32 = sadd.s32 %s31, 1
      %s33 = scalar_select %p30, %s31, %s32
      %p36 = pneg %p30
      %p37 = scmp.eq.s32.totalorder %s21, 1
      %p38 = por %p36, %p37
      %p39 = scmp.ne.s32.totalorder %s31, %s34
      %p40 = scmp.eq.s32.totalorder %s21, 0
      %p41 = por %p39, %p40
      %p42 = scmp.ne.s32.totalorder %s31, %s34
      %p43 = scmp.eq.s32.totalorder %s26, 1
      %p44 = por %p42, %p43
      %p45 = scmp.ne.s32.totalorder %s34, %s35
      %p46 = scmp.eq.s32.totalorder %s26, 0
      %p47 = por %p45, %p46
      %p48 = scmp.ne.s32.totalorder %s34, %s35
      %p49 = scmp.eq.s32.totalorder %s27, 1
      %p50 = por %p48, %p49
      %p52 = scmp.ne.s32.totalorder %s35, %s51
      %p53 = scmp.eq.s32.totalorder %s27, 0
      %p54 = por %p52, %p53
      %s56 = sadd.s32 %s55, 1
      %p59 = scmp.eq.s32.totalorder %s21, 1
      %p60 = scmp.ne.s32.totalorder %s55, %s57
      %p61 = scmp.eq.s32.totalorder %s21, 0
      %p62 = por %p60, %p61
      %p63 = scmp.ne.s32.totalorder %s55, %s57
      %p64 = scmp.eq.s32.totalorder %s26, 1
      %p65 = por %p63, %p64
      %p66 = scmp.ne.s32.totalorder %s57, %s58
      %p67 = scmp.eq.s32.totalorder %s26, 0
      %p68 = por %p66, %p67
      %p69 = scmp.ne.s32.totalorder %s57, %s58
      %p70 = scmp.eq.s32.totalorder %s27, 1
      %p71 = por %p69, %p70
      %p73 = scmp.ne.s32.totalorder %s58, %s72
      %p74 = scmp.eq.s32.totalorder %s27, 0
      %p75 = por %p73, %p74
      %s77 = sadd.s32 %s76, 1
      %p80 = scmp.eq.s32.totalorder %s21, 1
      %p81 = scmp.ne.s32.totalorder %s76, %s78
      %p82 = scmp.eq.s32.totalorder %s21, 0
      %p83 = por %p81, %p82
      %p84 = scmp.ne.s32.totalorder %s76, %s78
      %p85 = scmp.eq.s32.totalorder %s26, 1
      %p86 = por %p84, %p85
      %p87 = scmp.ne.s32.totalorder %s78, %s79
      %p88 = scmp.eq.s32.totalorder %s26, 0
      %p89 = por %p87, %p88
      %p90 = scmp.ne.s32.totalorder %s78, %s79
      %p91 = scmp.eq.s32.totalorder %s27, 1
      %p92 = por %p90, %p91
      %p94 = scmp.ne.s32.totalorder %s79, %s93
      %p95 = scmp.eq.s32.totalorder %s27, 0
      %p96 = por %p94, %p95
      %s98 = sadd.s32 %s97, 1
      %p101 = scmp.eq.s32.totalorder %s21, 1
      %p102 = scmp.ne.s32.totalorder %s97, %s99
      %p103 = scmp.eq.s32.totalorder %s21, 0
      %p104 = por %p102, %p103
      %p105 = scmp.ne.s32.totalorder %s97, %s99
      %p106 = scmp.eq.s32.totalorder %s26, 1
      %p107 = por %p105, %p106
      %p108 = scmp.ne.s32.totalorder %s99, %s100
      %p109 = scmp.eq.s32.totalorder %s26, 0
      %p110 = por %p108, %p109
      %p111 = scmp.ne.s32.totalorder %s99, %s100
      %p112 = scmp.eq.s32.totalorder %s27, 1
      %p113 = por %p111, %p112
      %p115 = scmp.ne.s32.totalorder %s100, %s114
      %p116 = scmp.eq.s32.totalorder %s27, 0
      %p117 = por %p115, %p116
      %s119 = sadd.s32 %s118, 1
      %p122 = scmp.eq.s32.totalorder %s21, 1
      %p123 = scmp.ne.s32.totalorder %s118, %s120
      %p124 = scmp.eq.s32.totalorder %s21, 0
      %p125 = por %p123, %p124
      %p126 = scmp.ne.s32.totalorder %s118, %s120
      %p127 = scmp.eq.s32.totalorder %s26, 1
      %p128 = por %p126, %p127
      %p129 = scmp.ne.s32.totalorder %s120, %s121
      %p130 = scmp.eq.s32.totalorder %s26, 0
      %p131 = por %p129, %p130
      %p132 = scmp.ne.s32.totalorder %s120, %s121
      %p133 = scmp.eq.s32.totalorder %s27, 1
      %p134 = por %p132, %p133
      %p136 = scmp.ne.s32.totalorder %s121, %s135
      %p137 = scmp.eq.s32.totalorder %s27, 0
      %p138 = por %p136, %p137
      %s140 = sadd.s32 %s139, 1
      %p143 = scmp.eq.s32.totalorder %s21, 1
      %p144 = scmp.ne.s32.totalorder %s139, %s141
      %p145 = scmp.eq.s32.totalorder %s21, 0
      %p146 = por %p144, %p145
      %p147 = scmp.ne.s32.totalorder %s139, %s141
      %p148 = scmp.eq.s32.totalorder %s26, 1
      %p149 = por %p147, %p148
      %p150 = scmp.ne.s32.totalorder %s141, %s142
      %p151 = scmp.eq.s32.totalorder %s26, 0
      %p152 = por %p150, %p151
      %p153 = scmp.ne.s32.totalorder %s141, %s142
      %p154 = scmp.eq.s32.totalorder %s27, 1
      %p155 = por %p153, %p154
      %p157 = scmp.ne.s32.totalorder %s142, %s156
      %p158 = scmp.eq.s32.totalorder %s27, 0
      %p159 = por %p157, %p158
      %s161 = sadd.s32 %s160, 1
      %p164 = scmp.eq.s32.totalorder %s21, 1
      %p165 = scmp.ne.s32.totalorder %s160, %s162
      %p166 = scmp.eq.s32.totalorder %s21, 0
      %p167 = por %p165, %p166
      %p168 = scmp.ne.s32.totalorder %s160, %s162
      %p169 = scmp.eq.s32.totalorder %s26, 1
      %p170 = por %p168, %p169
      %p171 = scmp.ne.s32.totalorder %s162, %s163
      %p172 = scmp.eq.s32.totalorder %s26, 0
      %p173 = por %p171, %p172
      %p174 = scmp.ne.s32.totalorder %s162, %s163
      %p175 = scmp.eq.s32.totalorder %s27, 1
      %p176 = por %p174, %p175
      %p178 = scmp.ne.s32.totalorder %s163, %s177
      %p179 = scmp.eq.s32.totalorder %s27, 0
      %p180 = por %p178, %p179
      %s181 = ssub.s32 %s21, %s28
      %p182 = scmp.eq.s32.totalorder %s181, 0
      %s184 = sadd.s32 %s183, 1
      %s185 = scalar_select %p182, %s183, %s184
      %p188 = pneg %p182
      %p189 = scmp.eq.s32.totalorder %s21, 1
      %p190 = por %p188, %p189
      %p191 = scmp.ne.s32.totalorder %s183, %s186
      %p192 = scmp.eq.s32.totalorder %s21, 0
      %p193 = por %p191, %p192
      %p194 = scmp.ne.s32.totalorder %s183, %s186
      %p195 = scmp.eq.s32.totalorder %s26, 1
      %p196 = por %p194, %p195
      %p197 = scmp.ne.s32.totalorder %s186, %s187
      %p198 = scmp.eq.s32.totalorder %s26, 0
      %p199 = por %p197, %p198
      %p200 = scmp.ne.s32.totalorder %s186, %s187
      %p201 = scmp.eq.s32.totalorder %s27, 1
      %p202 = por %p200, %p201
      %p204 = scmp.ne.s32.totalorder %s187, %s203
      %p205 = scmp.eq.s32.totalorder %s27, 0
      %p206 = por %p204, %p205
      %p207 = scmp.le.s32.totalorder 1, %s21
      %p208 = scmp.lt.s32.totalorder %s21, 3
      %p209 = pnand %p207, %p208
      %p210 = pneg %p209
      // Predicated region
      $region9: #{tpu_custom_call.1} parent=5 // pred_check
        _
      $region10: #{tpu_custom_call.1} parent=5 // pred_check_branch
        %212 = sbr.rel (%p209) target = $region12
      $region11: #{tpu_custom_call.1} parent=5 // pred_region
        %s213 = ssub.s32 %s21, 1
        // Predicated region
        $region13: #{tpu_custom_call.1} parent=11 // pred_check
          %p214 = pneg %p68
        $region14: #{tpu_custom_call.1} parent=11 // pred_check_branch
          %216 = sbr.rel (%p214) target = $region16
        $region15: #{tpu_custom_call.1} parent=11 // pred_region
          %s218 = ssub.s32 1024, 1024
          %219 = vsyncadd [#allocation6], %s218
          %s220 = sshll.u32 [#allocation5], 4
          %s221 = int_to_ptr.vmem [resolvable:$true] %s220
          %226 = dma.hbm_to_vmem [thread:$0]  %s1, 1024, %s221, [#allocation6], 64, 64, 4
        $region16: #{tpu_custom_call.1} parent=11 // pred_fallthru
          _
        // Predicated region
        $region17: #{tpu_custom_call.1} parent=11 // pred_check
          %p227 = pneg %p89
        $region18: #{tpu_custom_call.1} parent=11 // pred_check_branch
          %229 = sbr.rel (%p227) target = $region20
        $region19: #{tpu_custom_call.1} parent=11 // pred_region
          _
        $region20: #{tpu_custom_call.1} parent=11 // pred_fallthru
          _
        // Predicated region
        $region21: #{tpu_custom_call.1} parent=11 // pred_check
          %p230 = pneg %p110
        $region22: #{tpu_custom_call.1} parent=11 // pred_check_branch
          %232 = sbr.rel (%p230) target = $region24
        $region23: #{tpu_custom_call.1} parent=11 // pred_region
          %s234 = ssub.s32 256, 256
          %235 = vsyncadd [#allocation6], %s234
          %s236 = sshll.u32 [#allocation7], 4
          %s237 = int_to_ptr.vmem [resolvable:$true] %s236
          %242 = dma.hbm_to_vmem [thread:$0]  %s3, 256, %s237, [#allocation6], 128, 128, 8
        $region24: #{tpu_custom_call.1} parent=11 // pred_fallthru
          _
        // Predicated region
        $region25: #{tpu_custom_call.1} parent=11 // pred_check
          %p243 = pneg %p131
        $region26: #{tpu_custom_call.1} parent=11 // pred_check_branch
          %245 = sbr.rel (%p243) target = $region28
        $region27: #{tpu_custom_call.1} parent=11 // pred_region
          _
        $region28: #{tpu_custom_call.1} parent=11 // pred_fallthru
          _
        // Predicated region
        $region29: #{tpu_custom_call.1} parent=11 // pred_check
          %p246 = pneg %p152
        $region30: #{tpu_custom_call.1} parent=11 // pred_check_branch
          %248 = sbr.rel (%p246) target = $region32
        $region31: #{tpu_custom_call.1} parent=11 // pred_region
          %s250 = ssub.s32 1024, 1024
          %251 = vsyncadd [#allocation9], %s250
          %s252 = sshll.u32 [#allocation8], 4
          %s253 = int_to_ptr.vmem [resolvable:$true] %s252
          %258 = dma.hbm_to_vmem [thread:$0]  %s5, 1024, %s253, [#allocation9], 64, 64, 4
        $region32: #{tpu_custom_call.1} parent=11 // pred_fallthru
          _
        // Predicated region
        $region33: #{tpu_custom_call.1} parent=11 // pred_check
          %p259 = pneg %p173
        $region34: #{tpu_custom_call.1} parent=11 // pred_check_branch
          %261 = sbr.rel (%p259) target = $region36
        $region35: #{tpu_custom_call.1} parent=11 // pred_region
          _
        $region36: #{tpu_custom_call.1} parent=11 // pred_fallthru
          _
      $region12: #{tpu_custom_call.1} parent=5 // pred_fallthru
        _
      %p262 = scmp.lt.s32.totalorder %s21, 2
      // Predicated region
      $region37: #{tpu_custom_call.1} parent=5 // pred_check
        %p263 = pneg %p262
      $region38: #{tpu_custom_call.1} parent=5 // pred_check_branch
        %265 = sbr.rel (%p263) target = $region40
      $region39: #{tpu_custom_call.1} parent=5 // pred_region
        // Predicated region
        $region41: #{tpu_custom_call.1} parent=39 // pred_check
          %p266 = pneg %p41
        $region42: #{tpu_custom_call.1} parent=39 // pred_check_branch
          %268 = sbr.rel (%p266) target = $region44
        $region43: #{tpu_custom_call.1} parent=39 // pred_region
          %s269 = sand.u32 %s31, 1
          %s270 = scalar_lea.sflag [#allocation3], %s269
          %s271 = sand.u32 %s31, 1
          %s272 = smul.addr %s271, 128
          %s273 = scalar_lea.vmem [#allocation2], %s272
          %s275 = ssub.s32 2048, 2048
          %276 = vsyncadd %s270, %s275
          %s277 = smul.addr %s21, 32
          %s278 = smul.addr %s277, 64
          %s279 = scalar_lea.hbm %s0, %s278
          %s280 = sshll.u32 %s273, 4
          %s281 = int_to_ptr.vmem [resolvable:$true] %s280
          %286 = dma.hbm_to_vmem [thread:$0]  %s279, 2048, %s281, %s270, 64, 64, 4
        $region44: #{tpu_custom_call.1} parent=39 // pred_fallthru
          _
      $region40: #{tpu_custom_call.1} parent=5 // pred_fallthru
        _
      %p287 = scmp.le.s32.totalorder 1, %s21
      %p288 = scmp.lt.s32.totalorder %s21, 3
      %p289 = pnand %p287, %p288
      %p290 = pneg %p289
      // Predicated region
      $region45: #{tpu_custom_call.1} parent=5 // pred_check
        _
      $region46: #{tpu_custom_call.1} parent=5 // pred_check_branch
        %292 = sbr.rel (%p289) target = $region48
      $region47: #{tpu_custom_call.1} parent=5 // pred_region
        %s293 = ssub.s32 %s21, 1
        %s294 = sand.u32 %s34, 1
        %s295 = scalar_lea.sflag [#allocation3], %s294
        %s296 = sand.u32 %s34, 1
        %s297 = smul.addr %s296, 128
        %s298 = scalar_lea.vmem [#allocation2], %s297
        // Predicated region
        $region49: #{tpu_custom_call.1} parent=47 // pred_check
          %p299 = pneg %p47
        $region50: #{tpu_custom_call.1} parent=47 // pred_check_branch
          %301 = sbr.rel (%p299) target = $region52
        $region51: #{tpu_custom_call.1} parent=47 // pred_region
          %302 = dma.done %s295, 2048
        $region52: #{tpu_custom_call.1} parent=47 // pred_fallthru
          _
        // Predicated region
        $region53: #{tpu_custom_call.1} parent=47 // pred_check
          %p303 = pneg %p68
        $region54: #{tpu_custom_call.1} parent=47 // pred_check_branch
          %305 = sbr.rel (%p303) target = $region56
        $region55: #{tpu_custom_call.1} parent=47 // pred_region
          %306 = dma.done [#allocation6], 1024
        $region56: #{tpu_custom_call.1} parent=47 // pred_fallthru
          _
        // Predicated region
        $region57: #{tpu_custom_call.1} parent=47 // pred_check
          %p307 = pneg %p110
        $region58: #{tpu_custom_call.1} parent=47 // pred_check_branch
          %309 = sbr.rel (%p307) target = $region60
        $region59: #{tpu_custom_call.1} parent=47 // pred_region
          %310 = dma.done [#allocation6], 256
        $region60: #{tpu_custom_call.1} parent=47 // pred_fallthru
          _
        // Predicated region
        $region61: #{tpu_custom_call.1} parent=47 // pred_check
          %p311 = pneg %p152
        $region62: #{tpu_custom_call.1} parent=47 // pred_check_branch
          %313 = sbr.rel (%p311) target = $region64
        $region63: #{tpu_custom_call.1} parent=47 // pred_region
          %314 = dma.done [#allocation9], 1024
        $region64: #{tpu_custom_call.1} parent=47 // pred_fallthru
          _
        %s315 = sand.u32 %s34, 1
        %s316 = scalar_lea.sflag [#allocation3], %s315
        %s317 = sand.u32 %s34, 1
        %s318 = smul.addr %s317, 128
        %s319 = scalar_lea.vmem [#allocation2], %s318
        %p320 = pneg %p47
        %p321 = pneg %p44
        %p322 = pneg %p68
        %p323 = pneg %p65
        %p324 = pneg %p89
        %p325 = pneg %p86
        %p326 = pneg %p110
        %p327 = pneg %p107
        %p328 = pneg %p131
        %p329 = pneg %p128
        %p330 = pneg %p152
        %p331 = pneg %p149
        %p332 = pneg %p173
        %p333 = pneg %p170
        %p334 = pneg %p199
        %p335 = pneg %p196
        %s336 = sand.u32 %s186, 1
        %s337 = scalar_lea.sflag [#allocation4], %s336
        %s338 = sand.u32 %s186, 1
        %s339 = smul.addr %s338, 256
        %s340 = scalar_lea.vmem [#allocation10], %s339
        %v342 = vld [vmem:[%s298] sm:$0xf]
        %v343 = vld [vmem:[%s298 + $0x4] sm:$0xf]
        %v344 = vld [vmem:[%s298 + $0x8] sm:$0xf]
        %v345 = vld [vmem:[%s298 + $0xc] sm:$0xf]
        %v346 = vld [vmem:[%s298 + $0x10] sm:$0xf]
        %v347 = vld [vmem:[%s298 + $0x14] sm:$0xf]
        %v348 = vld [vmem:[%s298 + $0x18] sm:$0xf]
        %v349 = vld [vmem:[%s298 + $0x1c] sm:$0xf]
        %v350 = vld [vmem:[%s298 + $0x20] sm:$0xf]
        %v351 = vld [vmem:[%s298 + $0x24] sm:$0xf]
        %v352 = vld [vmem:[%s298 + $0x28] sm:$0xf]
        %v353 = vld [vmem:[%s298 + $0x2c] sm:$0xf]
        %v354 = vld [vmem:[%s298 + $0x30] sm:$0xf]
        %v355 = vld [vmem:[%s298 + $0x34] sm:$0xf]
        %v356 = vld [vmem:[%s298 + $0x38] sm:$0xf]
        %v357 = vld [vmem:[%s298 + $0x3c] sm:$0xf]
        %v358 = vld [vmem:[%s298 + $0x40] sm:$0xf]
        %v359 = vld [vmem:[%s298 + $0x44] sm:$0xf]
        %v360 = vld [vmem:[%s298 + $0x48] sm:$0xf]
        %v361 = vld [vmem:[%s298 + $0x4c] sm:$0xf]
        %v362 = vld [vmem:[%s298 + $0x50] sm:$0xf]
        %v363 = vld [vmem:[%s298 + $0x54] sm:$0xf]
        %v364 = vld [vmem:[%s298 + $0x58] sm:$0xf]
        %v365 = vld [vmem:[%s298 + $0x5c] sm:$0xf]
        %v366 = vld [vmem:[%s298 + $0x60] sm:$0xf]
        %v367 = vld [vmem:[%s298 + $0x64] sm:$0xf]
        %v368 = vld [vmem:[%s298 + $0x68] sm:$0xf]
        %v369 = vld [vmem:[%s298 + $0x6c] sm:$0xf]
        %v370 = vld [vmem:[%s298 + $0x70] sm:$0xf]
        %v371 = vld [vmem:[%s298 + $0x74] sm:$0xf]
        %v372 = vld [vmem:[%s298 + $0x78] sm:$0xf]
        %v373 = vld [vmem:[%s298 + $0x7c] sm:$0xf]
        %v374 = vld [vmem:[#allocation5] sm:$0xf]
        %v375 = vld [vmem:[#allocation5 + $0x4] sm:$0xf]
        %v376 = vld [vmem:[#allocation5 + $0x8] sm:$0xf]
        %v377 = vld [vmem:[#allocation5 + $0xc] sm:$0xf]
        %v378 = vld [vmem:[#allocation5 + $0x10] sm:$0xf]
        %v379 = vld [vmem:[#allocation5 + $0x14] sm:$0xf]
        %v380 = vld [vmem:[#allocation5 + $0x18] sm:$0xf]
        %v381 = vld [vmem:[#allocation5 + $0x1c] sm:$0xf]
        %v382 = vld [vmem:[#allocation5 + $0x20] sm:$0xf]
        %v383 = vld [vmem:[#allocation5 + $0x24] sm:$0xf]
        %v384 = vld [vmem:[#allocation5 + $0x28] sm:$0xf]
        %v385 = vld [vmem:[#allocation5 + $0x2c] sm:$0xf]
        %v386 = vld [vmem:[#allocation5 + $0x30] sm:$0xf]
        %v387 = vld [vmem:[#allocation5 + $0x34] sm:$0xf]
        %v388 = vld [vmem:[#allocation5 + $0x38] sm:$0xf]
        %v389 = vld [vmem:[#allocation5 + $0x3c] sm:$0xf]
        %v390 = vld [vmem:[%s2] sm:$0x1]
        %v392 = vlaneseq
        %v393 = vshrl.u32 %v392, 7
        %v394 = vsub.s32 0, %v393
        %v395 = vrot.slane %v390, %v394
        %v429 = vunpack.c.l.b16 %v342
        %v430 = vunpack.c.l.b16 %v343
        %v431 = vunpack.c.l.b16 %v344
        %v432 = vunpack.c.l.b16 %v345
        %v433 = vunpack.c.l.b16 %v346
        %v434 = vunpack.c.l.b16 %v347
        %v435 = vunpack.c.l.b16 %v348
        %v436 = vunpack.c.l.b16 %v349
        %v437 = vunpack.c.l.b16 %v350
        %v438 = vunpack.c.l.b16 %v351
        %v439 = vunpack.c.l.b16 %v352
        %v440 = vunpack.c.l.b16 %v353
        %v441 = vunpack.c.l.b16 %v354
        %v442 = vunpack.c.l.b16 %v355
        %v443 = vunpack.c.l.b16 %v356
        %v444 = vunpack.c.l.b16 %v357
        %v445 = vunpack.c.l.b16 %v358
        %v446 = vunpack.c.l.b16 %v359
        %v447 = vunpack.c.l.b16 %v360
        %v448 = vunpack.c.l.b16 %v361
        %v449 = vunpack.c.l.b16 %v362
        %v450 = vunpack.c.l.b16 %v363
        %v451 = vunpack.c.l.b16 %v364
        %v452 = vunpack.c.l.b16 %v365
        %v453 = vunpack.c.l.b16 %v366
        %v454 = vunpack.c.l.b16 %v367
        %v455 = vunpack.c.l.b16 %v368
        %v456 = vunpack.c.l.b16 %v369
        %v457 = vunpack.c.l.b16 %v370
        %v458 = vunpack.c.l.b16 %v371
        %v459 = vunpack.c.l.b16 %v372
        %v460 = vunpack.c.l.b16 %v373
        %v461 = vpack.c.b16 %v430, %v429
        %v462 = vpack.c.b16 %v432, %v431
        %v463 = vpack.c.b16 %v434, %v433
        %v464 = vpack.c.b16 %v436, %v435
        %v465 = vpack.c.b16 %v438, %v437
        %v466 = vpack.c.b16 %v440, %v439
        %v467 = vpack.c.b16 %v442, %v441
        %v468 = vpack.c.b16 %v444, %v443
        %v469 = vpack.c.b16 %v446, %v445
        %v470 = vpack.c.b16 %v448, %v447
        %v471 = vpack.c.b16 %v450, %v449
        %v472 = vpack.c.b16 %v452, %v451
        %v473 = vpack.c.b16 %v454, %v453
        %v474 = vpack.c.b16 %v456, %v455
        %v475 = vpack.c.b16 %v458, %v457
        %v476 = vpack.c.b16 %v460, %v459
        %v509 = vunpack.c.l.b16 %v374
        %v510 = vunpack.c.l.b16 %v375
        %v511 = vunpack.c.l.b16 %v376
        %v512 = vunpack.c.l.b16 %v377
        %v513 = vunpack.c.l.b16 %v378
        %v514 = vunpack.c.l.b16 %v379
        %v515 = vunpack.c.l.b16 %v380
        %v516 = vunpack.c.l.b16 %v381
        %v517 = vunpack.c.l.b16 %v382
        %v518 = vunpack.c.l.b16 %v383
        %v519 = vunpack.c.l.b16 %v384
        %v520 = vunpack.c.l.b16 %v385
        %v521 = vunpack.c.l.b16 %v386
        %v522 = vunpack.c.l.b16 %v387
        %v523 = vunpack.c.l.b16 %v388
        %v524 = vunpack.c.l.b16 %v389
        %v525 = vpack.c.b16 %v510, %v509
        %v526 = vpack.c.b16 %v512, %v511
        %v527 = vpack.c.b16 %v514, %v513
        %v528 = vpack.c.b16 %v516, %v515
        %v529 = vpack.c.b16 %v518, %v517
        %v530 = vpack.c.b16 %v520, %v519
        %v531 = vpack.c.b16 %v522, %v521
        %v532 = vpack.c.b16 %v524, %v523
        %541 = vmatprep.subr.bf16.mxu0 0
        %542 = vmatpush1.bf16.msra.mxu0 %v525
        %543 = vmatprep.subr.bf16.mxu0 0
        %544 = vmatpush1.bf16.msra.mxu0 %v526
        %545 = vmatprep.subr.bf16.mxu0 0
        %546 = vmatpush1.bf16.msra.mxu0 %v527
        %547 = vmatprep.subr.bf16.mxu0 0
        %548 = vmatpush1.bf16.msra.mxu0 %v528
        %549 = vmatprep.subr.bf16.mxu0 0
        %550 = vmatpush1.bf16.msra.mxu0 %v529
        %551 = vmatprep.subr.bf16.mxu0 0
        %552 = vmatpush1.bf16.msra.mxu0 %v530
        %553 = vmatprep.subr.bf16.mxu0 0
        %554 = vmatpush1.bf16.msra.mxu0 %v531
        %555 = vmatprep.subr.bf16.mxu0 0
        %556 = vmatpush1.bf16.msra.mxu0 %v532
        %557 = vmatprep.subr.bf16.mxu0 0
        %558 = vmatpush1.bf16.msra.mxu0 0
        %559 = vmatprep.subr.bf16.mxu0 0
        %560 = vmatpush1.bf16.msra.mxu0 0
        %561 = vmatprep.subr.bf16.mxu0 0
        %562 = vmatpush1.bf16.msra.mxu0 0
        %563 = vmatprep.subr.bf16.mxu0 0
        %564 = vmatpush1.bf16.msra.mxu0 0
        %565 = vmatprep.subr.bf16.mxu0 0
        %566 = vmatpush1.bf16.msra.mxu0 0
        %567 = vmatprep.subr.bf16.mxu0 0
        %568 = vmatpush1.bf16.msra.mxu0 0
        %569 = vmatprep.subr.bf16.mxu0 0
        %570 = vmatpush1.bf16.msra.mxu0 0
        %571 = vmatprep.subr.bf16.mxu0 0
        %572 = vmatpush1.bf16.msra.mxu0 0
        %573 = vmatprep.mubr.bf16.mxu0 0
        %574 = vmatmul.mubr.bf16.gmra.mrb[0].mxu0 %v461
        %v575 = vpop.f32.mrb[0].mxu0
        %v576 = vadd.f32 %v395, %v575
        %v577 = vpop.f32.mrb[0].mxu0
        %v578 = vpop.f32.mrb[0].mxu0
        %v579 = vadd.f32 %v395, %v578
        %v580 = vpop.f32.mrb[0].mxu0
        %581 = vmatprep.mubr.bf16.mxu0 0
        %582 = vmatmul.mubr.bf16.gmra.mrb[0].mxu0 %v462
        %v583 = vpop.f32.mrb[0].mxu0
        %v584 = vadd.f32 %v395, %v583
        %v585 = vpop.f32.mrb[0].mxu0
        %v586 = vpop.f32.mrb[0].mxu0
        %v587 = vadd.f32 %v395, %v586
        %v588 = vpop.f32.mrb[0].mxu0
        %589 = vmatprep.mubr.bf16.mxu0 0
        %590 = vmatmul.mubr.bf16.gmra.mrb[0].mxu0 %v463
        %v591 = vpop.f32.mrb[0].mxu0
        %v592 = vadd.f32 %v395, %v591
        %v593 = vpop.f32.mrb[0].mxu0
        %v594 = vpop.f32.mrb[0].mxu0
        %v595 = vadd.f32 %v395, %v594
        %v596 = vpop.f32.mrb[0].mxu0
        %597 = vmatprep.mubr.bf16.mxu0 0
        %598 = vmatmul.mubr.bf16.gmra.mrb[0].mxu0 %v464
        %v599 = vpop.f32.mrb[0].mxu0
        %v600 = vadd.f32 %v395, %v599
        %v601 = vpop.f32.mrb[0].mxu0
        %v602 = vpop.f32.mrb[0].mxu0
        %v603 = vadd.f32 %v395, %v602
        %v604 = vpop.f32.mrb[0].mxu0
        %605 = vmatprep.mubr.bf16.mxu0 0
        %606 = vmatmul.mubr.bf16.gmra.mrb[0].mxu0 %v465
        %v607 = vpop.f32.mrb[0].mxu0
        %v608 = vadd.f32 %v395, %v607
        %v609 = vpop.f32.mrb[0].mxu0
        %v610 = vpop.f32.mrb[0].mxu0
        %v611 = vadd.f32 %v395, %v610
        %v612 = vpop.f32.mrb[0].mxu0
        %613 = vmatprep.mubr.bf16.mxu0 0
        %614 = vmatmul.mubr.bf16.gmra.mrb[0].mxu0 %v466
        %v615 = vpop.f32.mrb[0].mxu0
        %v616 = vadd.f32 %v395, %v615
        %v617 = vpop.f32.mrb[0].mxu0
        %v618 = vpop.f32.mrb[0].mxu0
        %v619 = vadd.f32 %v395, %v618
        %v620 = vpop.f32.mrb[0].mxu0
        %621 = vmatprep.mubr.bf16.mxu0 0
        %622 = vmatmul.mubr.bf16.gmra.mrb[0].mxu0 %v467
        %v623 = vpop.f32.mrb[0].mxu0
        %v624 = vadd.f32 %v395, %v623
        %v625 = vpop.f32.mrb[0].mxu0
        %v626 = vpop.f32.mrb[0].mxu0
        %v627 = vadd.f32 %v395, %v626
        %v628 = vpop.f32.mrb[0].mxu0
        %629 = vmatprep.mubr.bf16.mxu0 0
        %630 = vmatmul.mubr.bf16.gmra.mrb[0].mxu0 %v468
        %v631 = vpop.f32.mrb[0].mxu0
        %v632 = vadd.f32 %v395, %v631
        %v633 = vpop.f32.mrb[0].mxu0
        %v634 = vpop.f32.mrb[0].mxu0
        %v635 = vadd.f32 %v395, %v634
        %v636 = vpop.f32.mrb[0].mxu0
        %637 = vmatprep.mubr.bf16.mxu0 0
        %638 = vmatmul.mubr.bf16.gmra.mrb[0].mxu0 %v469
        %v639 = vpop.f32.mrb[0].mxu0
        %v640 = vadd.f32 %v395, %v639
        %v641 = vpop.f32.mrb[0].mxu0
        %v642 = vpop.f32.mrb[0].mxu0
        %v643 = vadd.f32 %v395, %v642
        %v644 = vpop.f32.mrb[0].mxu0
        %645 = vmatprep.mubr.bf16.mxu0 0
        %646 = vmatmul.mubr.bf16.gmra.mrb[0].mxu0 %v470
        %v647 = vpop.f32.mrb[0].mxu0
        %v648 = vadd.f32 %v395, %v647
        %v649 = vpop.f32.mrb[0].mxu0
        %v650 = vpop.f32.mrb[0].mxu0
        %v651 = vadd.f32 %v395, %v650
        %v652 = vpop.f32.mrb[0].mxu0
        %653 = vmatprep.mubr.bf16.mxu0 0
        %654 = vmatmul.mubr.bf16.gmra.mrb[0].mxu0 %v471
        %v655 = vpop.f32.mrb[0].mxu0
        %v656 = vadd.f32 %v395, %v655
        %v657 = vpop.f32.mrb[0].mxu0
        %v658 = vpop.f32.mrb[0].mxu0
        %v659 = vadd.f32 %v395, %v658
        %v660 = vpop.f32.mrb[0].mxu0
        %661 = vmatprep.mubr.bf16.mxu0 0
        %662 = vmatmul.mubr.bf16.gmra.mrb[0].mxu0 %v472
        %v663 = vpop.f32.mrb[0].mxu0
        %v664 = vadd.f32 %v395, %v663
        %v665 = vpop.f32.mrb[0].mxu0
        %v666 = vpop.f32.mrb[0].mxu0
        %v667 = vadd.f32 %v395, %v666
        %v668 = vpop.f32.mrb[0].mxu0
        %669 = vmatprep.mubr.bf16.mxu0 0
        %670 = vmatmul.mubr.bf16.gmra.mrb[0].mxu0 %v473
        %v671 = vpop.f32.mrb[0].mxu0
        %v672 = vadd.f32 %v395, %v671
        %v673 = vpop.f32.mrb[0].mxu0
        %v674 = vpop.f32.mrb[0].mxu0
        %v675 = vadd.f32 %v395, %v674
        %v676 = vpop.f32.mrb[0].mxu0
        %677 = vmatprep.mubr.bf16.mxu0 0
        %678 = vmatmul.mubr.bf16.gmra.mrb[0].mxu0 %v474
        %v679 = vpop.f32.mrb[0].mxu0
        %v680 = vadd.f32 %v395, %v679
        %v681 = vpop.f32.mrb[0].mxu0
        %v682 = vpop.f32.mrb[0].mxu0
        %v683 = vadd.f32 %v395, %v682
        %v684 = vpop.f32.mrb[0].mxu0
        %685 = vmatprep.mubr.bf16.mxu0 0
        %686 = vmatmul.mubr.bf16.gmra.mrb[0].mxu0 %v475
        %v687 = vpop.f32.mrb[0].mxu0
        %v688 = vadd.f32 %v395, %v687
        %v689 = vpop.f32.mrb[0].mxu0
        %v690 = vpop.f32.mrb[0].mxu0
        %v691 = vadd.f32 %v395, %v690
        %v692 = vpop.f32.mrb[0].mxu0
        %693 = vmatprep.mubr.bf16.mxu0 0
        %694 = vmatmul.mubr.bf16.gmra.mrb[0].mxu0 %v476
        %v695 = vpop.f32.mrb[0].mxu0
        %v696 = vadd.f32 %v395, %v695
        %v697 = vpop.f32.mrb[0].mxu0
        %v698 = vpop.f32.mrb[0].mxu0
        %v699 = vadd.f32 %v395, %v698
        %v700 = vpop.f32.mrb[0].mxu0
        %701 = vdwg.mxu0
        %v702 = vmax.f32 %v576, 0.0
        %v703 = vmax.f32 %v579, 0.0
        %v704 = vmax.f32 %v584, 0.0
        %v705 = vmax.f32 %v587, 0.0
        %v706 = vmax.f32 %v592, 0.0
        %v707 = vmax.f32 %v595, 0.0
        %v708 = vmax.f32 %v600, 0.0
        %v709 = vmax.f32 %v603, 0.0
        %v710 = vmax.f32 %v608, 0.0
        %v711 = vmax.f32 %v611, 0.0
        %v712 = vmax.f32 %v616, 0.0
        %v713 = vmax.f32 %v619, 0.0
        %v714 = vmax.f32 %v624, 0.0
        %v715 = vmax.f32 %v627, 0.0
        %v716 = vmax.f32 %v632, 0.0
        %v717 = vmax.f32 %v635, 0.0
        %v718 = vmax.f32 %v640, 0.0
        %v719 = vmax.f32 %v643, 0.0
        %v720 = vmax.f32 %v648, 0.0
        %v721 = vmax.f32 %v651, 0.0
        %v722 = vmax.f32 %v656, 0.0
        %v723 = vmax.f32 %v659, 0.0
        %v724 = vmax.f32 %v664, 0.0
        %v725 = vmax.f32 %v667, 0.0
        %v726 = vmax.f32 %v672, 0.0
        %v727 = vmax.f32 %v675, 0.0
        %v728 = vmax.f32 %v680, 0.0
        %v729 = vmax.f32 %v683, 0.0
        %v730 = vmax.f32 %v688, 0.0
        %v731 = vmax.f32 %v691, 0.0
        %v732 = vmax.f32 %v696, 0.0
        %v733 = vmax.f32 %v699, 0.0
        %v734 = vmin.f32 %v702, 6.0
        %v735 = vmin.f32 %v703, 6.0
        %v736 = vmin.f32 %v704, 6.0
        %v737 = vmin.f32 %v705, 6.0
        %v738 = vmin.f32 %v706, 6.0
        %v739 = vmin.f32 %v707, 6.0
        %v740 = vmin.f32 %v708, 6.0
        %v741 = vmin.f32 %v709, 6.0
        %v742 = vmin.f32 %v710, 6.0
        %v743 = vmin.f32 %v711, 6.0
        %v744 = vmin.f32 %v712, 6.0
        %v745 = vmin.f32 %v713, 6.0
        %v746 = vmin.f32 %v714, 6.0
        %v747 = vmin.f32 %v715, 6.0
        %v748 = vmin.f32 %v716, 6.0
        %v749 = vmin.f32 %v717, 6.0
        %v750 = vmin.f32 %v718, 6.0
        %v751 = vmin.f32 %v719, 6.0
        %v752 = vmin.f32 %v720, 6.0
        %v753 = vmin.f32 %v721, 6.0
        %v754 = vmin.f32 %v722, 6.0
        %v755 = vmin.f32 %v723, 6.0
        %v756 = vmin.f32 %v724, 6.0
        %v757 = vmin.f32 %v725, 6.0
        %v758 = vmin.f32 %v726, 6.0
        %v759 = vmin.f32 %v727, 6.0
        %v760 = vmin.f32 %v728, 6.0
        %v761 = vmin.f32 %v729, 6.0
        %v762 = vmin.f32 %v730, 6.0
        %v763 = vmin.f32 %v731, 6.0
        %v764 = vmin.f32 %v732, 6.0
        %v765 = vmin.f32 %v733, 6.0
        %v766 = vld [vmem:[#allocation7] sm:$0xff]
        %v767 = vld [vmem:[#allocation7 + $0x8] sm:$0x1]
        %v768 = vlaneseq
        %v769 = vshrl.u32 %v768, 7
        %v770 = vadd.s32 %v769, 8
        %vm771 = vcmp.ge.s32.totalorder %v769, 1
        %vm772 = vcmp.ge.s32.totalorder %v770, 1
        %v773 = vsel %vm771, 1, 0
        %v774 = vsel %vm772, 1, 0
        %v775 = vcvt.s32.f32 0
        %v776 = vcvt.s32.f32 %v773
        %v777 = vcvt.s32.f32 %v774
        %v778 = vcvt.s32.f32 1
        %vm779 = vcmp.lt.s32.totalorder %v769, 15
        %vm780 = vcmp.lt.s32.totalorder %v770, 15
        %v781 = vsel %vm779, 1, 0
        %v782 = vsel %vm780, 1, 0
        %v783 = vcvt.s32.f32 %v781
        %v784 = vcvt.s32.f32 %v782
        %v785 = vrot.slane %v734, 7
        %v786 = vrot.slane %v735, 7
        %v787 = vrot.slane %v736, 7
        %v788 = vrot.slane %v737, 7
        %v789 = vrot.slane %v738, 7
        %v790 = vrot.slane %v739, 7
        %v791 = vrot.slane %v740, 7
        %v792 = vrot.slane %v741, 7
        %v793 = vrot.slane %v742, 7
        %v794 = vrot.slane %v743, 7
        %v795 = vrot.slane %v744, 7
        %v796 = vrot.slane %v745, 7
        %v797 = vrot.slane %v746, 7
        %v798 = vrot.slane %v747, 7
        %v799 = vrot.slane %v748, 7
        %v800 = vrot.slane %v749, 7
        %v801 = vrot.slane %v750, 7
        %v802 = vrot.slane %v751, 7
        %v803 = vrot.slane %v752, 7
        %v804 = vrot.slane %v753, 7
        %v805 = vrot.slane %v754, 7
        %v806 = vrot.slane %v755, 7
        %v807 = vrot.slane %v756, 7
        %v808 = vrot.slane %v757, 7
        %v809 = vrot.slane %v758, 7
        %v810 = vrot.slane %v759, 7
        %v811 = vrot.slane %v760, 7
        %v812 = vrot.slane %v761, 7
        %v813 = vrot.slane %v762, 7
        %v814 = vrot.slane %v763, 7
        %v815 = vrot.slane %v764, 7
        %v816 = vrot.slane %v765, 7
        %vm817 = vcmp.lt.s32.totalorder %v769, 1
        %v818 = vsel %vm817, %v815, %v816
        %v819 = vsel %vm817, %v814, %v815
        %v820 = vsel %vm817, %v813, %v814
        %v821 = vsel %vm817, %v812, %v813
        %v822 = vsel %vm817, %v811, %v812
        %v823 = vsel %vm817, %v810, %v811
        %v824 = vsel %vm817, %v809, %v810
        %v825 = vsel %vm817, %v808, %v809
        %v826 = vsel %vm817, %v807, %v808
        %v827 = vsel %vm817, %v806, %v807
        %v828 = vsel %vm817, %v805, %v806
        %v829 = vsel %vm817, %v804, %v805
        %v830 = vsel %vm817, %v803, %v804
        %v831 = vsel %vm817, %v802, %v803
        %v832 = vsel %vm817, %v801, %v802
        %v833 = vsel %vm817, %v800, %v801
        %v834 = vsel %vm817, %v799, %v800
        %v835 = vsel %vm817, %v798, %v799
        %v836 = vsel %vm817, %v797, %v798
        %v837 = vsel %vm817, %v796, %v797
        %v838 = vsel %vm817, %v795, %v796
        %v839 = vsel %vm817, %v794, %v795
        %v840 = vsel %vm817, %v793, %v794
        %v841 = vsel %vm817, %v792, %v793
        %v842 = vsel %vm817, %v791, %v792
        %v843 = vsel %vm817, %v790, %v791
        %v844 = vsel %vm817, %v789, %v790
        %v845 = vsel %vm817, %v788, %v789
        %v846 = vsel %vm817, %v787, %v788
        %v847 = vsel %vm817, %v786, %v787
        %v848 = vsel %vm817, %v785, %v786
        %v849 = vsel %vm817, %v816, %v785
        %v850 = vmul.f32 %v819, %v775
        %v851 = vmul.f32 %v818, %v775
        %v852 = vmul.f32 %v849, %v776
        %v853 = vmul.f32 %v848, %v777
        %v854 = vmul.f32 %v847, %v776
        %v855 = vmul.f32 %v846, %v777
        %v856 = vmul.f32 %v845, %v776
        %v857 = vmul.f32 %v844, %v777
        %v858 = vmul.f32 %v843, %v776
        %v859 = vmul.f32 %v842, %v777
        %v860 = vmul.f32 %v841, %v776
        %v861 = vmul.f32 %v840, %v777
        %v862 = vmul.f32 %v839, %v776
        %v863 = vmul.f32 %v838, %v777
        %v864 = vmul.f32 %v837, %v776
        %v865 = vmul.f32 %v836, %v777
        %v866 = vmul.f32 %v835, %v776
        %v867 = vmul.f32 %v834, %v777
        %v868 = vmul.f32 %v833, %v776
        %v869 = vmul.f32 %v832, %v777
        %v870 = vmul.f32 %v831, %v776
        %v871 = vmul.f32 %v830, %v777
        %v872 = vmul.f32 %v829, %v776
        %v873 = vmul.f32 %v828, %v777
        %v874 = vmul.f32 %v827, %v776
        %v875 = vmul.f32 %v826, %v777
        %v876 = vmul.f32 %v825, %v776
        %v877 = vmul.f32 %v824, %v777
        %v878 = vmul.f32 %v823, %v776
        %v879 = vmul.f32 %v822, %v777
        %v880 = vmul.f32 %v821, %v776
        %v881 = vmul.f32 %v820, %v777
        %v882 = vlaneseq
        %v883 = vshrl.u32 %v882, 7
        %v884 = vsub.s32 0, %v883
        %v885 = vrot.slane %v766, %v884
        %v886 = vmul.f32 %v850, %v885
        %v887 = vmul.f32 %v851, %v885
        %v888 = vmul.f32 %v852, %v885
        %v889 = vmul.f32 %v853, %v885
        %v890 = vmul.f32 %v854, %v885
        %v891 = vmul.f32 %v855, %v885
        %v892 = vmul.f32 %v856, %v885
        %v893 = vmul.f32 %v857, %v885
        %v894 = vmul.f32 %v858, %v885
        %v895 = vmul.f32 %v859, %v885
        %v896 = vmul.f32 %v860, %v885
        %v897 = vmul.f32 %v861, %v885
        %v898 = vmul.f32 %v862, %v885
        %v899 = vmul.f32 %v863, %v885
        %v900 = vmul.f32 %v864, %v885
        %v901 = vmul.f32 %v865, %v885
        %v902 = vmul.f32 %v866, %v885
        %v903 = vmul.f32 %v867, %v885
        %v904 = vmul.f32 %v868, %v885
        %v905 = vmul.f32 %v869, %v885
        %v906 = vmul.f32 %v870, %v885
        %v907 = vmul.f32 %v871, %v885
        %v908 = vmul.f32 %v872, %v885
        %v909 = vmul.f32 %v873, %v885
        %v910 = vmul.f32 %v874, %v885
        %v911 = vmul.f32 %v875, %v885
        %v912 = vmul.f32 %v876, %v885
        %v913 = vmul.f32 %v877, %v885
        %v914 = vmul.f32 %v878, %v885
        %v915 = vmul.f32 %v879, %v885
        %v916 = vmul.f32 %v880, %v885
        %v917 = vmul.f32 %v881, %v885
        %v918 = vadd.f32 %v886, 0.0
        %v919 = vadd.f32 %v887, 0.0
        %v920 = vadd.f32 %v888, 0.0
        %v921 = vadd.f32 %v889, 0.0
        %v922 = vadd.f32 %v890, 0.0
        %v923 = vadd.f32 %v891, 0.0
        %v924 = vadd.f32 %v892, 0.0
        %v925 = vadd.f32 %v893, 0.0
        %v926 = vadd.f32 %v894, 0.0
        %v927 = vadd.f32 %v895, 0.0
        %v928 = vadd.f32 %v896, 0.0
        %v929 = vadd.f32 %v897, 0.0
        %v930 = vadd.f32 %v898, 0.0
        %v931 = vadd.f32 %v899, 0.0
        %v932 = vadd.f32 %v900, 0.0
        %v933 = vadd.f32 %v901, 0.0
        %v934 = vadd.f32 %v902, 0.0
        %v935 = vadd.f32 %v903, 0.0
        %v936 = vadd.f32 %v904, 0.0
        %v937 = vadd.f32 %v905, 0.0
        %v938 = vadd.f32 %v906, 0.0
        %v939 = vadd.f32 %v907, 0.0
        %v940 = vadd.f32 %v908, 0.0
        %v941 = vadd.f32 %v909, 0.0
        %v942 = vadd.f32 %v910, 0.0
        %v943 = vadd.f32 %v911, 0.0
        %v944 = vadd.f32 %v912, 0.0
        %v945 = vadd.f32 %v913, 0.0
        %v946 = vadd.f32 %v914, 0.0
        %v947 = vadd.f32 %v915, 0.0
        %v948 = vadd.f32 %v916, 0.0
        %v949 = vadd.f32 %v917, 0.0
        %v950 = vmul.f32 %v764, %v775
        %v951 = vmul.f32 %v765, %v775
        %v952 = vmul.f32 %v734, %v778
        %v953 = vmul.f32 %v735, %v778
        %v954 = vmul.f32 %v736, %v778
        %v955 = vmul.f32 %v737, %v778
        %v956 = vmul.f32 %v738, %v778
        %v957 = vmul.f32 %v739, %v778
        %v958 = vmul.f32 %v740, %v778
        %v959 = vmul.f32 %v741, %v778
        %v960 = vmul.f32 %v742, %v778
        %v961 = vmul.f32 %v743, %v778
        %v962 = vmul.f32 %v744, %v778
        %v963 = vmul.f32 %v745, %v778
        %v964 = vmul.f32 %v746, %v778
        %v965 = vmul.f32 %v747, %v778
        %v966 = vmul.f32 %v748, %v778
        %v967 = vmul.f32 %v749, %v778
        %v968 = vmul.f32 %v750, %v778
        %v969 = vmul.f32 %v751, %v778
        %v970 = vmul.f32 %v752, %v778
        %v971 = vmul.f32 %v753, %v778
        %v972 = vmul.f32 %v754, %v778
        %v973 = vmul.f32 %v755, %v778
        %v974 = vmul.f32 %v756, %v778
        %v975 = vmul.f32 %v757, %v778
        %v976 = vmul.f32 %v758, %v778
        %v977 = vmul.f32 %v759, %v778
        %v978 = vmul.f32 %v760, %v778
        %v979 = vmul.f32 %v761, %v778
        %v980 = vmul.f32 %v762, %v778
        %v981 = vmul.f32 %v763, %v778
        %v982 = vlaneseq
        %v983 = vshrl.u32 %v982, 7
        %v984 = vsub.s32 1, %v983
        %v985 = vrot.slane %v766, %v984
        %v986 = vmul.f32 %v950, %v985
        %v987 = vmul.f32 %v951, %v985
        %v988 = vmul.f32 %v952, %v985
        %v989 = vmul.f32 %v953, %v985
        %v990 = vmul.f32 %v954, %v985
        %v991 = vmul.f32 %v955, %v985
        %v992 = vmul.f32 %v956, %v985
        %v993 = vmul.f32 %v957, %v985
        %v994 = vmul.f32 %v958, %v985
        %v995 = vmul.f32 %v959, %v985
        %v996 = vmul.f32 %v960, %v985
        %v997 = vmul.f32 %v961, %v985
        %v998 = vmul.f32 %v962, %v985
        %v999 = vmul.f32 %v963, %v985
        %v1000 = vmul.f32 %v964, %v985
        %v1001 = vmul.f32 %v965, %v985
        %v1002 = vmul.f32 %v966, %v985
        %v1003 = vmul.f32 %v967, %v985
        %v1004 = vmul.f32 %v968, %v985
        %v1005 = vmul.f32 %v969, %v985
        %v1006 = vmul.f32 %v970, %v985
        %v1007 = vmul.f32 %v971, %v985
        %v1008 = vmul.f32 %v972, %v985
        %v1009 = vmul.f32 %v973, %v985
        %v1010 = vmul.f32 %v974, %v985
        %v1011 = vmul.f32 %v975, %v985
        %v1012 = vmul.f32 %v976, %v985
        %v1013 = vmul.f32 %v977, %v985
        %v1014 = vmul.f32 %v978, %v985
        %v1015 = vmul.f32 %v979, %v985
        %v1016 = vmul.f32 %v980, %v985
        %v1017 = vmul.f32 %v981, %v985
        %v1018 = vadd.f32 %v918, %v986
        %v1019 = vadd.f32 %v919, %v987
        %v1020 = vadd.f32 %v920, %v988
        %v1021 = vadd.f32 %v921, %v989
        %v1022 = vadd.f32 %v922, %v990
        %v1023 = vadd.f32 %v923, %v991
        %v1024 = vadd.f32 %v924, %v992
        %v1025 = vadd.f32 %v925, %v993
        %v1026 = vadd.f32 %v926, %v994
        %v1027 = vadd.f32 %v927, %v995
        %v1028 = vadd.f32 %v928, %v996
        %v1029 = vadd.f32 %v929, %v997
        %v1030 = vadd.f32 %v930, %v998
        %v1031 = vadd.f32 %v931, %v999
        %v1032 = vadd.f32 %v932, %v1000
        %v1033 = vadd.f32 %v933, %v1001
        %v1034 = vadd.f32 %v934, %v1002
        %v1035 = vadd.f32 %v935, %v1003
        %v1036 = vadd.f32 %v936, %v1004
        %v1037 = vadd.f32 %v937, %v1005
        %v1038 = vadd.f32 %v938, %v1006
        %v1039 = vadd.f32 %v939, %v1007
        %v1040 = vadd.f32 %v940, %v1008
        %v1041 = vadd.f32 %v941, %v1009
        %v1042 = vadd.f32 %v942, %v1010
        %v1043 = vadd.f32 %v943, %v1011
        %v1044 = vadd.f32 %v944, %v1012
        %v1045 = vadd.f32 %v945, %v1013
        %v1046 = vadd.f32 %v946, %v1014
        %v1047 = vadd.f32 %v947, %v1015
        %v1048 = vadd.f32 %v948, %v1016
        %v1049 = vadd.f32 %v949, %v1017
        %v1050 = vrot.slane %v734, 1
        %v1051 = vrot.slane %v735, 1
        %v1052 = vrot.slane %v736, 1
        %v1053 = vrot.slane %v737, 1
        %v1054 = vrot.slane %v738, 1
        %v1055 = vrot.slane %v739, 1
        %v1056 = vrot.slane %v740, 1
        %v1057 = vrot.slane %v741, 1
        %v1058 = vrot.slane %v742, 1
        %v1059 = vrot.slane %v743, 1
        %v1060 = vrot.slane %v744, 1
        %v1061 = vrot.slane %v745, 1
        %v1062 = vrot.slane %v746, 1
        %v1063 = vrot.slane %v747, 1
        %v1064 = vrot.slane %v748, 1
        %v1065 = vrot.slane %v749, 1
        %v1066 = vrot.slane %v750, 1
        %v1067 = vrot.slane %v751, 1
        %v1068 = vrot.slane %v752, 1
        %v1069 = vrot.slane %v753, 1
        %v1070 = vrot.slane %v754, 1
        %v1071 = vrot.slane %v755, 1
        %v1072 = vrot.slane %v756, 1
        %v1073 = vrot.slane %v757, 1
        %v1074 = vrot.slane %v758, 1
        %v1075 = vrot.slane %v759, 1
        %v1076 = vrot.slane %v760, 1
        %v1077 = vrot.slane %v761, 1
        %v1078 = vrot.slane %v762, 1
        %v1079 = vrot.slane %v763, 1
        %v1080 = vrot.slane %v764, 1
        %v1081 = vrot.slane %v765, 1
        %vm1082 = vcmp.lt.s32.totalorder %v769, 7
        %v1083 = vsel %vm1082, %v1080, %v1081
        %v1084 = vsel %vm1082, %v1079, %v1080
        %v1085 = vsel %vm1082, %v1078, %v1079
        %v1086 = vsel %vm1082, %v1077, %v1078
        %v1087 = vsel %vm1082, %v1076, %v1077
        %v1088 = vsel %vm1082, %v1075, %v1076
        %v1089 = vsel %vm1082, %v1074, %v1075
        %v1090 = vsel %vm1082, %v1073, %v1074
        %v1091 = vsel %vm1082, %v1072, %v1073
        %v1092 = vsel %vm1082, %v1071, %v1072
        %v1093 = vsel %vm1082, %v1070, %v1071
        %v1094 = vsel %vm1082, %v1069, %v1070
        %v1095 = vsel %vm1082, %v1068, %v1069
        %v1096 = vsel %vm1082, %v1067, %v1068
        %v1097 = vsel %vm1082, %v1066, %v1067
        %v1098 = vsel %vm1082, %v1065, %v1066
        %v1099 = vsel %vm1082, %v1064, %v1065
        %v1100 = vsel %vm1082, %v1063, %v1064
        %v1101 = vsel %vm1082, %v1062, %v1063
        %v1102 = vsel %vm1082, %v1061, %v1062
        %v1103 = vsel %vm1082, %v1060, %v1061
        %v1104 = vsel %vm1082, %v1059, %v1060
        %v1105 = vsel %vm1082, %v1058, %v1059
        %v1106 = vsel %vm1082, %v1057, %v1058
        %v1107 = vsel %vm1082, %v1056, %v1057
        %v1108 = vsel %vm1082, %v1055, %v1056
        %v1109 = vsel %vm1082, %v1054, %v1055
        %v1110 = vsel %vm1082, %v1053, %v1054
        %v1111 = vsel %vm1082, %v1052, %v1053
        %v1112 = vsel %vm1082, %v1051, %v1052
        %v1113 = vsel %vm1082, %v1050, %v1051
        %v1114 = vsel %vm1082, %v1081, %v1050
        %v1115 = vmul.f32 %v1083, %v775
        %v1116 = vmul.f32 %v1114, %v775
        %v1117 = vmul.f32 %v1113, %v783
        %v1118 = vmul.f32 %v1112, %v784
        %v1119 = vmul.f32 %v1111, %v783
        %v1120 = vmul.f32 %v1110, %v784
        %v1121 = vmul.f32 %v1109, %v783
        %v1122 = vmul.f32 %v1108, %v784
        %v1123 = vmul.f32 %v1107, %v783
        %v1124 = vmul.f32 %v1106, %v784
        %v1125 = vmul.f32 %v1105, %v783
        %v1126 = vmul.f32 %v1104, %v784
        %v1127 = vmul.f32 %v1103, %v783
        %v1128 = vmul.f32 %v1102, %v784
        %v1129 = vmul.f32 %v1101, %v783
        %v1130 = vmul.f32 %v1100, %v784
        %v1131 = vmul.f32 %v1099, %v783
        %v1132 = vmul.f32 %v1098, %v784
        %v1133 = vmul.f32 %v1097, %v783
        %v1134 = vmul.f32 %v1096, %v784
        %v1135 = vmul.f32 %v1095, %v783
        %v1136 = vmul.f32 %v1094, %v784
        %v1137 = vmul.f32 %v1093, %v783
        %v1138 = vmul.f32 %v1092, %v784
        %v1139 = vmul.f32 %v1091, %v783
        %v1140 = vmul.f32 %v1090, %v784
        %v1141 = vmul.f32 %v1089, %v783
        %v1142 = vmul.f32 %v1088, %v784
        %v1143 = vmul.f32 %v1087, %v783
        %v1144 = vmul.f32 %v1086, %v784
        %v1145 = vmul.f32 %v1085, %v783
        %v1146 = vmul.f32 %v1084, %v784
        %v1147 = vlaneseq
        %v1148 = vshrl.u32 %v1147, 7
        %v1149 = vsub.s32 2, %v1148
        %v1150 = vrot.slane %v766, %v1149
        %v1151 = vmul.f32 %v1115, %v1150
        %v1152 = vmul.f32 %v1116, %v1150
        %v1153 = vmul.f32 %v1117, %v1150
        %v1154 = vmul.f32 %v1118, %v1150
        %v1155 = vmul.f32 %v1119, %v1150
        %v1156 = vmul.f32 %v1120, %v1150
        %v1157 = vmul.f32 %v1121, %v1150
        %v1158 = vmul.f32 %v1122, %v1150
        %v1159 = vmul.f32 %v1123, %v1150
        %v1160 = vmul.f32 %v1124, %v1150
        %v1161 = vmul.f32 %v1125, %v1150
        %v1162 = vmul.f32 %v1126, %v1150
        %v1163 = vmul.f32 %v1127, %v1150
        %v1164 = vmul.f32 %v1128, %v1150
        %v1165 = vmul.f32 %v1129, %v1150
        %v1166 = vmul.f32 %v1130, %v1150
        %v1167 = vmul.f32 %v1131, %v1150
        %v1168 = vmul.f32 %v1132, %v1150
        %v1169 = vmul.f32 %v1133, %v1150
        %v1170 = vmul.f32 %v1134, %v1150
        %v1171 = vmul.f32 %v1135, %v1150
        %v1172 = vmul.f32 %v1136, %v1150
        %v1173 = vmul.f32 %v1137, %v1150
        %v1174 = vmul.f32 %v1138, %v1150
        %v1175 = vmul.f32 %v1139, %v1150
        %v1176 = vmul.f32 %v1140, %v1150
        %v1177 = vmul.f32 %v1141, %v1150
        %v1178 = vmul.f32 %v1142, %v1150
        %v1179 = vmul.f32 %v1143, %v1150
        %v1180 = vmul.f32 %v1144, %v1150
        %v1181 = vmul.f32 %v1145, %v1150
        %v1182 = vmul.f32 %v1146, %v1150
        %v1183 = vadd.f32 %v1018, %v1151
        %v1184 = vadd.f32 %v1019, %v1152
        %v1185 = vadd.f32 %v1020, %v1153
        %v1186 = vadd.f32 %v1021, %v1154
        %v1187 = vadd.f32 %v1022, %v1155
        %v1188 = vadd.f32 %v1023, %v1156
        %v1189 = vadd.f32 %v1024, %v1157
        %v1190 = vadd.f32 %v1025, %v1158
        %v1191 = vadd.f32 %v1026, %v1159
        %v1192 = vadd.f32 %v1027, %v1160
        %v1193 = vadd.f32 %v1028, %v1161
        %v1194 = vadd.f32 %v1029, %v1162
        %v1195 = vadd.f32 %v1030, %v1163
        %v1196 = vadd.f32 %v1031, %v1164
        %v1197 = vadd.f32 %v1032, %v1165
        %v1198 = vadd.f32 %v1033, %v1166
        %v1199 = vadd.f32 %v1034, %v1167
        %v1200 = vadd.f32 %v1035, %v1168
        %v1201 = vadd.f32 %v1036, %v1169
        %v1202 = vadd.f32 %v1037, %v1170
        %v1203 = vadd.f32 %v1038, %v1171
        %v1204 = vadd.f32 %v1039, %v1172
        %v1205 = vadd.f32 %v1040, %v1173
        %v1206 = vadd.f32 %v1041, %v1174
        %v1207 = vadd.f32 %v1042, %v1175
        %v1208 = vadd.f32 %v1043, %v1176
        %v1209 = vadd.f32 %v1044, %v1177
        %v1210 = vadd.f32 %v1045, %v1178
        %v1211 = vadd.f32 %v1046, %v1179
        %v1212 = vadd.f32 %v1047, %v1180
        %v1213 = vadd.f32 %v1048, %v1181
        %v1214 = vadd.f32 %v1049, %v1182
        %v1215 = vmul.f32 %v819, %v776
        %v1216 = vmul.f32 %v818, %v777
        %v1217 = vlaneseq
        %v1218 = vshrl.u32 %v1217, 7
        %v1219 = vsub.s32 3, %v1218
        %v1220 = vrot.slane %v766, %v1219
        %v1221 = vmul.f32 %v852, %v1220
        %v1222 = vmul.f32 %v853, %v1220
        %v1223 = vmul.f32 %v854, %v1220
        %v1224 = vmul.f32 %v855, %v1220
        %v1225 = vmul.f32 %v856, %v1220
        %v1226 = vmul.f32 %v857, %v1220
        %v1227 = vmul.f32 %v858, %v1220
        %v1228 = vmul.f32 %v859, %v1220
        %v1229 = vmul.f32 %v860, %v1220
        %v1230 = vmul.f32 %v861, %v1220
        %v1231 = vmul.f32 %v862, %v1220
        %v1232 = vmul.f32 %v863, %v1220
        %v1233 = vmul.f32 %v864, %v1220
        %v1234 = vmul.f32 %v865, %v1220
        %v1235 = vmul.f32 %v866, %v1220
        %v1236 = vmul.f32 %v867, %v1220
        %v1237 = vmul.f32 %v868, %v1220
        %v1238 = vmul.f32 %v869, %v1220
        %v1239 = vmul.f32 %v870, %v1220
        %v1240 = vmul.f32 %v871, %v1220
        %v1241 = vmul.f32 %v872, %v1220
        %v1242 = vmul.f32 %v873, %v1220
        %v1243 = vmul.f32 %v874, %v1220
        %v1244 = vmul.f32 %v875, %v1220
        %v1245 = vmul.f32 %v876, %v1220
        %v1246 = vmul.f32 %v877, %v1220
        %v1247 = vmul.f32 %v878, %v1220
        %v1248 = vmul.f32 %v879, %v1220
        %v1249 = vmul.f32 %v880, %v1220
        %v1250 = vmul.f32 %v881, %v1220
        %v1251 = vmul.f32 %v1215, %v1220
        %v1252 = vmul.f32 %v1216, %v1220
        %v1253 = vadd.f32 %v1183, %v1221
        %v1254 = vadd.f32 %v1184, %v1222
        %v1255 = vadd.f32 %v1185, %v1223
        %v1256 = vadd.f32 %v1186, %v1224
        %v1257 = vadd.f32 %v1187, %v1225
        %v1258 = vadd.f32 %v1188, %v1226
        %v1259 = vadd.f32 %v1189, %v1227
        %v1260 = vadd.f32 %v1190, %v1228
        %v1261 = vadd.f32 %v1191, %v1229
        %v1262 = vadd.f32 %v1192, %v1230
        %v1263 = vadd.f32 %v1193, %v1231
        %v1264 = vadd.f32 %v1194, %v1232
        %v1265 = vadd.f32 %v1195, %v1233
        %v1266 = vadd.f32 %v1196, %v1234
        %v1267 = vadd.f32 %v1197, %v1235
        %v1268 = vadd.f32 %v1198, %v1236
        %v1269 = vadd.f32 %v1199, %v1237
        %v1270 = vadd.f32 %v1200, %v1238
        %v1271 = vadd.f32 %v1201, %v1239
        %v1272 = vadd.f32 %v1202, %v1240
        %v1273 = vadd.f32 %v1203, %v1241
        %v1274 = vadd.f32 %v1204, %v1242
        %v1275 = vadd.f32 %v1205, %v1243
        %v1276 = vadd.f32 %v1206, %v1244
        %v1277 = vadd.f32 %v1207, %v1245
        %v1278 = vadd.f32 %v1208, %v1246
        %v1279 = vadd.f32 %v1209, %v1247
        %v1280 = vadd.f32 %v1210, %v1248
        %v1281 = vadd.f32 %v1211, %v1249
        %v1282 = vadd.f32 %v1212, %v1250
        %v1283 = vadd.f32 %v1213, %v1251
        %v1284 = vadd.f32 %v1214, %v1252
        %v1285 = vlaneseq
        %v1286 = vshrl.u32 %v1285, 7
        %v1287 = vsub.s32 4, %v1286
        %v1288 = vrot.slane %v766, %v1287
        %v1289 = vmul.f32 %v734, %v1288
        %v1290 = vmul.f32 %v735, %v1288
        %v1291 = vmul.f32 %v736, %v1288
        %v1292 = vmul.f32 %v737, %v1288
        %v1293 = vmul.f32 %v738, %v1288
        %v1294 = vmul.f32 %v739, %v1288
        %v1295 = vmul.f32 %v740, %v1288
        %v1296 = vmul.f32 %v741, %v1288
        %v1297 = vmul.f32 %v742, %v1288
        %v1298 = vmul.f32 %v743, %v1288
        %v1299 = vmul.f32 %v744, %v1288
        %v1300 = vmul.f32 %v745, %v1288
        %v1301 = vmul.f32 %v746, %v1288
        %v1302 = vmul.f32 %v747, %v1288
        %v1303 = vmul.f32 %v748, %v1288
        %v1304 = vmul.f32 %v749, %v1288
        %v1305 = vmul.f32 %v750, %v1288
        %v1306 = vmul.f32 %v751, %v1288
        %v1307 = vmul.f32 %v752, %v1288
        %v1308 = vmul.f32 %v753, %v1288
        %v1309 = vmul.f32 %v754, %v1288
        %v1310 = vmul.f32 %v755, %v1288
        %v1311 = vmul.f32 %v756, %v1288
        %v1312 = vmul.f32 %v757, %v1288
        %v1313 = vmul.f32 %v758, %v1288
        %v1314 = vmul.f32 %v759, %v1288
        %v1315 = vmul.f32 %v760, %v1288
        %v1316 = vmul.f32 %v761, %v1288
        %v1317 = vmul.f32 %v762, %v1288
        %v1318 = vmul.f32 %v763, %v1288
        %v1319 = vmul.f32 %v764, %v1288
        %v1320 = vmul.f32 %v765, %v1288
        %v1321 = vadd.f32 %v1253, %v1289
        %v1322 = vadd.f32 %v1254, %v1290
        %v1323 = vadd.f32 %v1255, %v1291
        %v1324 = vadd.f32 %v1256, %v1292
        %v1325 = vadd.f32 %v1257, %v1293
        %v1326 = vadd.f32 %v1258, %v1294
        %v1327 = vadd.f32 %v1259, %v1295
        %v1328 = vadd.f32 %v1260, %v1296
        %v1329 = vadd.f32 %v1261, %v1297
        %v1330 = vadd.f32 %v1262, %v1298
        %v1331 = vadd.f32 %v1263, %v1299
        %v1332 = vadd.f32 %v1264, %v1300
        %v1333 = vadd.f32 %v1265, %v1301
        %v1334 = vadd.f32 %v1266, %v1302
        %v1335 = vadd.f32 %v1267, %v1303
        %v1336 = vadd.f32 %v1268, %v1304
        %v1337 = vadd.f32 %v1269, %v1305
        %v1338 = vadd.f32 %v1270, %v1306
        %v1339 = vadd.f32 %v1271, %v1307
        %v1340 = vadd.f32 %v1272, %v1308
        %v1341 = vadd.f32 %v1273, %v1309
        %v1342 = vadd.f32 %v1274, %v1310
        %v1343 = vadd.f32 %v1275, %v1311
        %v1344 = vadd.f32 %v1276, %v1312
        %v1345 = vadd.f32 %v1277, %v1313
        %v1346 = vadd.f32 %v1278, %v1314
        %v1347 = vadd.f32 %v1279, %v1315
        %v1348 = vadd.f32 %v1280, %v1316
        %v1349 = vadd.f32 %v1281, %v1317
        %v1350 = vadd.f32 %v1282, %v1318
        %v1351 = vadd.f32 %v1283, %v1319
        %v1352 = vadd.f32 %v1284, %v1320
        %v1353 = vmul.f32 %v1083, %v783
        %v1354 = vmul.f32 %v1114, %v784
        %v1355 = vlaneseq
        %v1356 = vshrl.u32 %v1355, 7
        %v1357 = vsub.s32 5, %v1356
        %v1358 = vrot.slane %v766, %v1357
        %v1359 = vmul.f32 %v1117, %v1358
        %v1360 = vmul.f32 %v1118, %v1358
        %v1361 = vmul.f32 %v1119, %v1358
        %v1362 = vmul.f32 %v1120, %v1358
        %v1363 = vmul.f32 %v1121, %v1358
        %v1364 = vmul.f32 %v1122, %v1358
        %v1365 = vmul.f32 %v1123, %v1358
        %v1366 = vmul.f32 %v1124, %v1358
        %v1367 = vmul.f32 %v1125, %v1358
        %v1368 = vmul.f32 %v1126, %v1358
        %v1369 = vmul.f32 %v1127, %v1358
        %v1370 = vmul.f32 %v1128, %v1358
        %v1371 = vmul.f32 %v1129, %v1358
        %v1372 = vmul.f32 %v1130, %v1358
        %v1373 = vmul.f32 %v1131, %v1358
        %v1374 = vmul.f32 %v1132, %v1358
        %v1375 = vmul.f32 %v1133, %v1358
        %v1376 = vmul.f32 %v1134, %v1358
        %v1377 = vmul.f32 %v1135, %v1358
        %v1378 = vmul.f32 %v1136, %v1358
        %v1379 = vmul.f32 %v1137, %v1358
        %v1380 = vmul.f32 %v1138, %v1358
        %v1381 = vmul.f32 %v1139, %v1358
        %v1382 = vmul.f32 %v1140, %v1358
        %v1383 = vmul.f32 %v1141, %v1358
        %v1384 = vmul.f32 %v1142, %v1358
        %v1385 = vmul.f32 %v1143, %v1358
        %v1386 = vmul.f32 %v1144, %v1358
        %v1387 = vmul.f32 %v1145, %v1358
        %v1388 = vmul.f32 %v1146, %v1358
        %v1389 = vmul.f32 %v1353, %v1358
        %v1390 = vmul.f32 %v1354, %v1358
        %v1391 = vadd.f32 %v1321, %v1359
        %v1392 = vadd.f32 %v1322, %v1360
        %v1393 = vadd.f32 %v1323, %v1361
        %v1394 = vadd.f32 %v1324, %v1362
        %v1395 = vadd.f32 %v1325, %v1363
        %v1396 = vadd.f32 %v1326, %v1364
        %v1397 = vadd.f32 %v1327, %v1365
        %v1398 = vadd.f32 %v1328, %v1366
        %v1399 = vadd.f32 %v1329, %v1367
        %v1400 = vadd.f32 %v1330, %v1368
        %v1401 = vadd.f32 %v1331, %v1369
        %v1402 = vadd.f32 %v1332, %v1370
        %v1403 = vadd.f32 %v1333, %v1371
        %v1404 = vadd.f32 %v1334, %v1372
        %v1405 = vadd.f32 %v1335, %v1373
        %v1406 = vadd.f32 %v1336, %v1374
        %v1407 = vadd.f32 %v1337, %v1375
        %v1408 = vadd.f32 %v1338, %v1376
        %v1409 = vadd.f32 %v1339, %v1377
        %v1410 = vadd.f32 %v1340, %v1378
        %v1411 = vadd.f32 %v1341, %v1379
        %v1412 = vadd.f32 %v1342, %v1380
        %v1413 = vadd.f32 %v1343, %v1381
        %v1414 = vadd.f32 %v1344, %v1382
        %v1415 = vadd.f32 %v1345, %v1383
        %v1416 = vadd.f32 %v1346, %v1384
        %v1417 = vadd.f32 %v1347, %v1385
        %v1418 = vadd.f32 %v1348, %v1386
        %v1419 = vadd.f32 %v1349, %v1387
        %v1420 = vadd.f32 %v1350, %v1388
        %v1421 = vadd.f32 %v1351, %v1389
        %v1422 = vadd.f32 %v1352, %v1390
        %v1423 = vmul.f32 %v849, %v775
        %v1424 = vmul.f32 %v848, %v775
        %v1425 = vlaneseq
        %v1426 = vshrl.u32 %v1425, 7
        %v1427 = vsub.s32 6, %v1426
        %v1428 = vrot.slane %v766, %v1427
        %v1429 = vmul.f32 %v854, %v1428
        %v1430 = vmul.f32 %v855, %v1428
        %v1431 = vmul.f32 %v856, %v1428
        %v1432 = vmul.f32 %v857, %v1428
        %v1433 = vmul.f32 %v858, %v1428
        %v1434 = vmul.f32 %v859, %v1428
        %v1435 = vmul.f32 %v860, %v1428
        %v1436 = vmul.f32 %v861, %v1428
        %v1437 = vmul.f32 %v862, %v1428
        %v1438 = vmul.f32 %v863, %v1428
        %v1439 = vmul.f32 %v864, %v1428
        %v1440 = vmul.f32 %v865, %v1428
        %v1441 = vmul.f32 %v866, %v1428
        %v1442 = vmul.f32 %v867, %v1428
        %v1443 = vmul.f32 %v868, %v1428
        %v1444 = vmul.f32 %v869, %v1428
        %v1445 = vmul.f32 %v870, %v1428
        %v1446 = vmul.f32 %v871, %v1428
        %v1447 = vmul.f32 %v872, %v1428
        %v1448 = vmul.f32 %v873, %v1428
        %v1449 = vmul.f32 %v874, %v1428
        %v1450 = vmul.f32 %v875, %v1428
        %v1451 = vmul.f32 %v876, %v1428
        %v1452 = vmul.f32 %v877, %v1428
        %v1453 = vmul.f32 %v878, %v1428
        %v1454 = vmul.f32 %v879, %v1428
        %v1455 = vmul.f32 %v880, %v1428
        %v1456 = vmul.f32 %v881, %v1428
        %v1457 = vmul.f32 %v1215, %v1428
        %v1458 = vmul.f32 %v1216, %v1428
        %v1459 = vmul.f32 %v1423, %v1428
        %v1460 = vmul.f32 %v1424, %v1428
        %v1461 = vadd.f32 %v1391, %v1429
        %v1462 = vadd.f32 %v1392, %v1430
        %v1463 = vadd.f32 %v1393, %v1431
        %v1464 = vadd.f32 %v1394, %v1432
        %v1465 = vadd.f32 %v1395, %v1433
        %v1466 = vadd.f32 %v1396, %v1434
        %v1467 = vadd.f32 %v1397, %v1435
        %v1468 = vadd.f32 %v1398, %v1436
        %v1469 = vadd.f32 %v1399, %v1437
        %v1470 = vadd.f32 %v1400, %v1438
        %v1471 = vadd.f32 %v1401, %v1439
        %v1472 = vadd.f32 %v1402, %v1440
        %v1473 = vadd.f32 %v1403, %v1441
        %v1474 = vadd.f32 %v1404, %v1442
        %v1475 = vadd.f32 %v1405, %v1443
        %v1476 = vadd.f32 %v1406, %v1444
        %v1477 = vadd.f32 %v1407, %v1445
        %v1478 = vadd.f32 %v1408, %v1446
        %v1479 = vadd.f32 %v1409, %v1447
        %v1480 = vadd.f32 %v1410, %v1448
        %v1481 = vadd.f32 %v1411, %v1449
        %v1482 = vadd.f32 %v1412, %v1450
        %v1483 = vadd.f32 %v1413, %v1451
        %v1484 = vadd.f32 %v1414, %v1452
        %v1485 = vadd.f32 %v1415, %v1453
        %v1486 = vadd.f32 %v1416, %v1454
        %v1487 = vadd.f32 %v1417, %v1455
        %v1488 = vadd.f32 %v1418, %v1456
        %v1489 = vadd.f32 %v1419, %v1457
        %v1490 = vadd.f32 %v1420, %v1458
        %v1491 = vadd.f32 %v1421, %v1459
        %v1492 = vadd.f32 %v1422, %v1460
        %v1493 = vmul.f32 %v764, %v778
        %v1494 = vmul.f32 %v765, %v778
        %v1495 = vmul.f32 %v734, %v775
        %v1496 = vmul.f32 %v735, %v775
        %v1497 = vlaneseq
        %v1498 = vshrl.u32 %v1497, 7
        %v1499 = vsub.s32 7, %v1498
        %v1500 = vrot.slane %v766, %v1499
        %v1501 = vmul.f32 %v954, %v1500
        %v1502 = vmul.f32 %v955, %v1500
        %v1503 = vmul.f32 %v956, %v1500
        %v1504 = vmul.f32 %v957, %v1500
        %v1505 = vmul.f32 %v958, %v1500
        %v1506 = vmul.f32 %v959, %v1500
        %v1507 = vmul.f32 %v960, %v1500
        %v1508 = vmul.f32 %v961, %v1500
        %v1509 = vmul.f32 %v962, %v1500
        %v1510 = vmul.f32 %v963, %v1500
        %v1511 = vmul.f32 %v964, %v1500
        %v1512 = vmul.f32 %v965, %v1500
        %v1513 = vmul.f32 %v966, %v1500
        %v1514 = vmul.f32 %v967, %v1500
        %v1515 = vmul.f32 %v968, %v1500
        %v1516 = vmul.f32 %v969, %v1500
        %v1517 = vmul.f32 %v970, %v1500
        %v1518 = vmul.f32 %v971, %v1500
        %v1519 = vmul.f32 %v972, %v1500
        %v1520 = vmul.f32 %v973, %v1500
        %v1521 = vmul.f32 %v974, %v1500
        %v1522 = vmul.f32 %v975, %v1500
        %v1523 = vmul.f32 %v976, %v1500
        %v1524 = vmul.f32 %v977, %v1500
        %v1525 = vmul.f32 %v978, %v1500
        %v1526 = vmul.f32 %v979, %v1500
        %v1527 = vmul.f32 %v980, %v1500
        %v1528 = vmul.f32 %v981, %v1500
        %v1529 = vmul.f32 %v1493, %v1500
        %v1530 = vmul.f32 %v1494, %v1500
        %v1531 = vmul.f32 %v1495, %v1500
        %v1532 = vmul.f32 %v1496, %v1500
        %v1533 = vadd.f32 %v1461, %v1501
        %v1534 = vadd.f32 %v1462, %v1502
        %v1535 = vadd.f32 %v1463, %v1503
        %v1536 = vadd.f32 %v1464, %v1504
        %v1537 = vadd.f32 %v1465, %v1505
        %v1538 = vadd.f32 %v1466, %v1506
        %v1539 = vadd.f32 %v1467, %v1507
        %v1540 = vadd.f32 %v1468, %v1508
        %v1541 = vadd.f32 %v1469, %v1509
        %v1542 = vadd.f32 %v1470, %v1510
        %v1543 = vadd.f32 %v1471, %v1511
        %v1544 = vadd.f32 %v1472, %v1512
        %v1545 = vadd.f32 %v1473, %v1513
        %v1546 = vadd.f32 %v1474, %v1514
        %v1547 = vadd.f32 %v1475, %v1515
        %v1548 = vadd.f32 %v1476, %v1516
        %v1549 = vadd.f32 %v1477, %v1517
        %v1550 = vadd.f32 %v1478, %v1518
        %v1551 = vadd.f32 %v1479, %v1519
        %v1552 = vadd.f32 %v1480, %v1520
        %v1553 = vadd.f32 %v1481, %v1521
        %v1554 = vadd.f32 %v1482, %v1522
        %v1555 = vadd.f32 %v1483, %v1523
        %v1556 = vadd.f32 %v1484, %v1524
        %v1557 = vadd.f32 %v1485, %v1525
        %v1558 = vadd.f32 %v1486, %v1526
        %v1559 = vadd.f32 %v1487, %v1527
        %v1560 = vadd.f32 %v1488, %v1528
        %v1561 = vadd.f32 %v1489, %v1529
        %v1562 = vadd.f32 %v1490, %v1530
        %v1563 = vadd.f32 %v1491, %v1531
        %v1564 = vadd.f32 %v1492, %v1532
        %v1565 = vmul.f32 %v1113, %v775
        %v1566 = vmul.f32 %v1112, %v775
        %v1567 = vlaneseq
        %v1568 = vshrl.u32 %v1567, 7
        %v1569 = vsub.s32 0, %v1568
        %v1570 = vrot.slane %v767, %v1569
        %v1571 = vmul.f32 %v1119, %v1570
        %v1572 = vmul.f32 %v1120, %v1570
        %v1573 = vmul.f32 %v1121, %v1570
        %v1574 = vmul.f32 %v1122, %v1570
        %v1575 = vmul.f32 %v1123, %v1570
        %v1576 = vmul.f32 %v1124, %v1570
        %v1577 = vmul.f32 %v1125, %v1570
        %v1578 = vmul.f32 %v1126, %v1570
        %v1579 = vmul.f32 %v1127, %v1570
        %v1580 = vmul.f32 %v1128, %v1570
        %v1581 = vmul.f32 %v1129, %v1570
        %v1582 = vmul.f32 %v1130, %v1570
        %v1583 = vmul.f32 %v1131, %v1570
        %v1584 = vmul.f32 %v1132, %v1570
        %v1585 = vmul.f32 %v1133, %v1570
        %v1586 = vmul.f32 %v1134, %v1570
        %v1587 = vmul.f32 %v1135, %v1570
        %v1588 = vmul.f32 %v1136, %v1570
        %v1589 = vmul.f32 %v1137, %v1570
        %v1590 = vmul.f32 %v1138, %v1570
        %v1591 = vmul.f32 %v1139, %v1570
        %v1592 = vmul.f32 %v1140, %v1570
        %v1593 = vmul.f32 %v1141, %v1570
        %v1594 = vmul.f32 %v1142, %v1570
        %v1595 = vmul.f32 %v1143, %v1570
        %v1596 = vmul.f32 %v1144, %v1570
        %v1597 = vmul.f32 %v1145, %v1570
        %v1598 = vmul.f32 %v1146, %v1570
        %v1599 = vmul.f32 %v1353, %v1570
        %v1600 = vmul.f32 %v1354, %v1570
        %v1601 = vmul.f32 %v1565, %v1570
        %v1602 = vmul.f32 %v1566, %v1570
        %v1603 = vadd.f32 %v1533, %v1571
        %v1604 = vadd.f32 %v1534, %v1572
        %v1605 = vadd.f32 %v1535, %v1573
        %v1606 = vadd.f32 %v1536, %v1574
        %v1607 = vadd.f32 %v1537, %v1575
        %v1608 = vadd.f32 %v1538, %v1576
        %v1609 = vadd.f32 %v1539, %v1577
        %v1610 = vadd.f32 %v1540, %v1578
        %v1611 = vadd.f32 %v1541, %v1579
        %v1612 = vadd.f32 %v1542, %v1580
        %v1613 = vadd.f32 %v1543, %v1581
        %v1614 = vadd.f32 %v1544, %v1582
        %v1615 = vadd.f32 %v1545, %v1583
        %v1616 = vadd.f32 %v1546, %v1584
        %v1617 = vadd.f32 %v1547, %v1585
        %v1618 = vadd.f32 %v1548, %v1586
        %v1619 = vadd.f32 %v1549, %v1587
        %v1620 = vadd.f32 %v1550, %v1588
        %v1621 = vadd.f32 %v1551, %v1589
        %v1622 = vadd.f32 %v1552, %v1590
        %v1623 = vadd.f32 %v1553, %v1591
        %v1624 = vadd.f32 %v1554, %v1592
        %v1625 = vadd.f32 %v1555, %v1593
        %v1626 = vadd.f32 %v1556, %v1594
        %v1627 = vadd.f32 %v1557, %v1595
        %v1628 = vadd.f32 %v1558, %v1596
        %v1629 = vadd.f32 %v1559, %v1597
        %v1630 = vadd.f32 %v1560, %v1598
        %v1631 = vadd.f32 %v1561, %v1599
        %v1632 = vadd.f32 %v1562, %v1600
        %v1633 = vadd.f32 %v1563, %v1601
        %v1634 = vadd.f32 %v1564, %v1602
        %v1635 = vld [vmem:[%s4] sm:$0x1]
        %v1637 = vlaneseq
        %v1638 = vshrl.u32 %v1637, 7
        %v1639 = vsub.s32 0, %v1638
        %v1640 = vrot.slane %v1635, %v1639
        %v1642 = vadd.f32 %v1603, %v1640
        %v1643 = vadd.f32 %v1604, %v1640
        %v1644 = vadd.f32 %v1605, %v1640
        %v1645 = vadd.f32 %v1606, %v1640
        %v1646 = vadd.f32 %v1607, %v1640
        %v1647 = vadd.f32 %v1608, %v1640
        %v1648 = vadd.f32 %v1609, %v1640
        %v1649 = vadd.f32 %v1610, %v1640
        %v1650 = vadd.f32 %v1611, %v1640
        %v1651 = vadd.f32 %v1612, %v1640
        %v1652 = vadd.f32 %v1613, %v1640
        %v1653 = vadd.f32 %v1614, %v1640
        %v1654 = vadd.f32 %v1615, %v1640
        %v1655 = vadd.f32 %v1616, %v1640
        %v1656 = vadd.f32 %v1617, %v1640
        %v1657 = vadd.f32 %v1618, %v1640
        %v1658 = vadd.f32 %v1619, %v1640
        %v1659 = vadd.f32 %v1620, %v1640
        %v1660 = vadd.f32 %v1621, %v1640
        %v1661 = vadd.f32 %v1622, %v1640
        %v1662 = vadd.f32 %v1623, %v1640
        %v1663 = vadd.f32 %v1624, %v1640
        %v1664 = vadd.f32 %v1625, %v1640
        %v1665 = vadd.f32 %v1626, %v1640
        %v1666 = vadd.f32 %v1627, %v1640
        %v1667 = vadd.f32 %v1628, %v1640
        %v1668 = vadd.f32 %v1629, %v1640
        %v1669 = vadd.f32 %v1630, %v1640
        %v1670 = vadd.f32 %v1631, %v1640
        %v1671 = vadd.f32 %v1632, %v1640
        %v1672 = vadd.f32 %v1633, %v1640
        %v1673 = vadd.f32 %v1634, %v1640
        %v1674 = vmax.f32 %v1642, 0.0
        %v1675 = vmax.f32 %v1643, 0.0
        %v1676 = vmax.f32 %v1644, 0.0
        %v1677 = vmax.f32 %v1645, 0.0
        %v1678 = vmax.f32 %v1646, 0.0
        %v1679 = vmax.f32 %v1647, 0.0
        %v1680 = vmax.f32 %v1648, 0.0
        %v1681 = vmax.f32 %v1649, 0.0
        %v1682 = vmax.f32 %v1650, 0.0
        %v1683 = vmax.f32 %v1651, 0.0
        %v1684 = vmax.f32 %v1652, 0.0
        %v1685 = vmax.f32 %v1653, 0.0
        %v1686 = vmax.f32 %v1654, 0.0
        %v1687 = vmax.f32 %v1655, 0.0
        %v1688 = vmax.f32 %v1656, 0.0
        %v1689 = vmax.f32 %v1657, 0.0
        %v1690 = vmax.f32 %v1658, 0.0
        %v1691 = vmax.f32 %v1659, 0.0
        %v1692 = vmax.f32 %v1660, 0.0
        %v1693 = vmax.f32 %v1661, 0.0
        %v1694 = vmax.f32 %v1662, 0.0
        %v1695 = vmax.f32 %v1663, 0.0
        %v1696 = vmax.f32 %v1664, 0.0
        %v1697 = vmax.f32 %v1665, 0.0
        %v1698 = vmax.f32 %v1666, 0.0
        %v1699 = vmax.f32 %v1667, 0.0
        %v1700 = vmax.f32 %v1668, 0.0
        %v1701 = vmax.f32 %v1669, 0.0
        %v1702 = vmax.f32 %v1670, 0.0
        %v1703 = vmax.f32 %v1671, 0.0
        %v1704 = vmax.f32 %v1672, 0.0
        %v1705 = vmax.f32 %v1673, 0.0
        %v1706 = vmin.f32 %v1674, 6.0
        %v1707 = vmin.f32 %v1675, 6.0
        %v1708 = vmin.f32 %v1676, 6.0
        %v1709 = vmin.f32 %v1677, 6.0
        %v1710 = vmin.f32 %v1678, 6.0
        %v1711 = vmin.f32 %v1679, 6.0
        %v1712 = vmin.f32 %v1680, 6.0
        %v1713 = vmin.f32 %v1681, 6.0
        %v1714 = vmin.f32 %v1682, 6.0
        %v1715 = vmin.f32 %v1683, 6.0
        %v1716 = vmin.f32 %v1684, 6.0
        %v1717 = vmin.f32 %v1685, 6.0
        %v1718 = vmin.f32 %v1686, 6.0
        %v1719 = vmin.f32 %v1687, 6.0
        %v1720 = vmin.f32 %v1688, 6.0
        %v1721 = vmin.f32 %v1689, 6.0
        %v1722 = vmin.f32 %v1690, 6.0
        %v1723 = vmin.f32 %v1691, 6.0
        %v1724 = vmin.f32 %v1692, 6.0
        %v1725 = vmin.f32 %v1693, 6.0
        %v1726 = vmin.f32 %v1694, 6.0
        %v1727 = vmin.f32 %v1695, 6.0
        %v1728 = vmin.f32 %v1696, 6.0
        %v1729 = vmin.f32 %v1697, 6.0
        %v1730 = vmin.f32 %v1698, 6.0
        %v1731 = vmin.f32 %v1699, 6.0
        %v1732 = vmin.f32 %v1700, 6.0
        %v1733 = vmin.f32 %v1701, 6.0
        %v1734 = vmin.f32 %v1702, 6.0
        %v1735 = vmin.f32 %v1703, 6.0
        %v1736 = vmin.f32 %v1704, 6.0
        %v1737 = vmin.f32 %v1705, 6.0
        %v1738 = vpack.c.bf16 %v1707, %v1706
        %v1739 = vpack.c.bf16 %v1709, %v1708
        %v1740 = vpack.c.bf16 %v1711, %v1710
        %v1741 = vpack.c.bf16 %v1713, %v1712
        %v1742 = vpack.c.bf16 %v1715, %v1714
        %v1743 = vpack.c.bf16 %v1717, %v1716
        %v1744 = vpack.c.bf16 %v1719, %v1718
        %v1745 = vpack.c.bf16 %v1721, %v1720
        %v1746 = vpack.c.bf16 %v1723, %v1722
        %v1747 = vpack.c.bf16 %v1725, %v1724
        %v1748 = vpack.c.bf16 %v1727, %v1726
        %v1749 = vpack.c.bf16 %v1729, %v1728
        %v1750 = vpack.c.bf16 %v1731, %v1730
        %v1751 = vpack.c.bf16 %v1733, %v1732
        %v1752 = vpack.c.bf16 %v1735, %v1734
        %v1753 = vpack.c.bf16 %v1737, %v1736
        %v1754 = vld [vmem:[#allocation8] sm:$0xf]
        %v1755 = vld [vmem:[#allocation8 + $0x4] sm:$0xf]
        %v1756 = vld [vmem:[#allocation8 + $0x8] sm:$0xf]
        %v1757 = vld [vmem:[#allocation8 + $0xc] sm:$0xf]
        %v1758 = vld [vmem:[#allocation8 + $0x10] sm:$0xf]
        %v1759 = vld [vmem:[#allocation8 + $0x14] sm:$0xf]
        %v1760 = vld [vmem:[#allocation8 + $0x18] sm:$0xf]
        %v1761 = vld [vmem:[#allocation8 + $0x1c] sm:$0xf]
        %v1762 = vld [vmem:[#allocation8 + $0x20] sm:$0xf]
        %v1763 = vld [vmem:[#allocation8 + $0x24] sm:$0xf]
        %v1764 = vld [vmem:[#allocation8 + $0x28] sm:$0xf]
        %v1765 = vld [vmem:[#allocation8 + $0x2c] sm:$0xf]
        %v1766 = vld [vmem:[#allocation8 + $0x30] sm:$0xf]
        %v1767 = vld [vmem:[#allocation8 + $0x34] sm:$0xf]
        %v1768 = vld [vmem:[#allocation8 + $0x38] sm:$0xf]
        %v1769 = vld [vmem:[#allocation8 + $0x3c] sm:$0xf]
        %v1770 = vld [vmem:[%s6] sm:$0x1]
        %v1772 = vlaneseq
        %v1773 = vshrl.u32 %v1772, 7
        %v1774 = vsub.s32 0, %v1773
        %v1775 = vrot.slane %v1770, %v1774
        %v1793 = vunpack.c.l.b16 %v1754
        %v1794 = vunpack.c.l.b16 %v1755
        %v1795 = vunpack.c.l.b16 %v1756
        %v1796 = vunpack.c.l.b16 %v1757
        %v1797 = vunpack.c.l.b16 %v1758
        %v1798 = vunpack.c.l.b16 %v1759
        %v1799 = vunpack.c.l.b16 %v1760
        %v1800 = vunpack.c.l.b16 %v1761
        %v1801 = vunpack.c.l.b16 %v1762
        %v1802 = vunpack.c.l.b16 %v1763
        %v1803 = vunpack.c.l.b16 %v1764
        %v1804 = vunpack.c.l.b16 %v1765
        %v1805 = vunpack.c.l.b16 %v1766
        %v1806 = vunpack.c.l.b16 %v1767
        %v1807 = vunpack.c.l.b16 %v1768
        %v1808 = vunpack.c.l.b16 %v1769
        %v1809 = vpack.c.b16 %v1794, %v1793
        %v1810 = vpack.c.b16 %v1796, %v1795
        %v1811 = vpack.c.b16 %v1798, %v1797
        %v1812 = vpack.c.b16 %v1800, %v1799
        %v1813 = vpack.c.b16 %v1802, %v1801
        %v1814 = vpack.c.b16 %v1804, %v1803
        %v1815 = vpack.c.b16 %v1806, %v1805
        %v1816 = vpack.c.b16 %v1808, %v1807
        %1825 = vmatprep.subr.bf16.mxu0 0
        %1826 = vmatpush1.bf16.msra.mxu0 %v1809
        %1827 = vmatprep.subr.bf16.mxu0 0
        %1828 = vmatpush1.bf16.msra.mxu0 %v1810
        %1829 = vmatprep.subr.bf16.mxu0 0
        %1830 = vmatpush1.bf16.msra.mxu0 %v1811
        %1831 = vmatprep.subr.bf16.mxu0 0
        %1832 = vmatpush1.bf16.msra.mxu0 %v1812
        %1833 = vmatprep.subr.bf16.mxu0 0
        %1834 = vmatpush1.bf16.msra.mxu0 %v1813
        %1835 = vmatprep.subr.bf16.mxu0 0
        %1836 = vmatpush1.bf16.msra.mxu0 %v1814
        %1837 = vmatprep.subr.bf16.mxu0 0
        %1838 = vmatpush1.bf16.msra.mxu0 %v1815
        %1839 = vmatprep.subr.bf16.mxu0 0
        %1840 = vmatpush1.bf16.msra.mxu0 %v1816
        %1841 = vmatprep.subr.bf16.mxu0 0
        %1842 = vmatpush1.bf16.msra.mxu0 0
        %1843 = vmatprep.subr.bf16.mxu0 0
        %1844 = vmatpush1.bf16.msra.mxu0 0
        %1845 = vmatprep.subr.bf16.mxu0 0
        %1846 = vmatpush1.bf16.msra.mxu0 0
        %1847 = vmatprep.subr.bf16.mxu0 0
        %1848 = vmatpush1.bf16.msra.mxu0 0
        %1849 = vmatprep.subr.bf16.mxu0 0
        %1850 = vmatpush1.bf16.msra.mxu0 0
        %1851 = vmatprep.subr.bf16.mxu0 0
        %1852 = vmatpush1.bf16.msra.mxu0 0
        %1853 = vmatprep.subr.bf16.mxu0 0
        %1854 = vmatpush1.bf16.msra.mxu0 0
        %1855 = vmatprep.subr.bf16.mxu0 0
        %1856 = vmatpush1.bf16.msra.mxu0 0
        %1857 = vmatprep.mubr.bf16.mxu0 0
        %1858 = vmatmul.mubr.bf16.gmra.mrb[0].mxu0 %v1738
        %v1859 = vpop.f32.mrb[0].mxu0
        %v1860 = vadd.f32 %v1775, %v1859
        %v1861 = vpop.f32.mrb[0].mxu0
        %v1862 = vpop.f32.mrb[0].mxu0
        %v1863 = vadd.f32 %v1775, %v1862
        %v1864 = vpop.f32.mrb[0].mxu0
        %1865 = vmatprep.mubr.bf16.mxu0 0
        %1866 = vmatmul.mubr.bf16.gmra.mrb[0].mxu0 %v1739
        %v1867 = vpop.f32.mrb[0].mxu0
        %v1868 = vadd.f32 %v1775, %v1867
        %v1869 = vpop.f32.mrb[0].mxu0
        %v1870 = vpop.f32.mrb[0].mxu0
        %v1871 = vadd.f32 %v1775, %v1870
        %v1872 = vpop.f32.mrb[0].mxu0
        %1873 = vmatprep.mubr.bf16.mxu0 0
        %1874 = vmatmul.mubr.bf16.gmra.mrb[0].mxu0 %v1740
        %v1875 = vpop.f32.mrb[0].mxu0
        %v1876 = vadd.f32 %v1775, %v1875
        %v1877 = vpop.f32.mrb[0].mxu0
        %v1878 = vpop.f32.mrb[0].mxu0
        %v1879 = vadd.f32 %v1775, %v1878
        %v1880 = vpop.f32.mrb[0].mxu0
        %1881 = vmatprep.mubr.bf16.mxu0 0
        %1882 = vmatmul.mubr.bf16.gmra.mrb[0].mxu0 %v1741
        %v1883 = vpop.f32.mrb[0].mxu0
        %v1884 = vadd.f32 %v1775, %v1883
        %v1885 = vpop.f32.mrb[0].mxu0
        %v1886 = vpop.f32.mrb[0].mxu0
        %v1887 = vadd.f32 %v1775, %v1886
        %v1888 = vpop.f32.mrb[0].mxu0
        %1889 = vmatprep.mubr.bf16.mxu0 0
        %1890 = vmatmul.mubr.bf16.gmra.mrb[0].mxu0 %v1742
        %v1891 = vpop.f32.mrb[0].mxu0
        %v1892 = vadd.f32 %v1775, %v1891
        %v1893 = vpop.f32.mrb[0].mxu0
        %v1894 = vpop.f32.mrb[0].mxu0
        %v1895 = vadd.f32 %v1775, %v1894
        %v1896 = vpop.f32.mrb[0].mxu0
        %1897 = vmatprep.mubr.bf16.mxu0 0
        %1898 = vmatmul.mubr.bf16.gmra.mrb[0].mxu0 %v1743
        %v1899 = vpop.f32.mrb[0].mxu0
        %v1900 = vadd.f32 %v1775, %v1899
        %v1901 = vpop.f32.mrb[0].mxu0
        %v1902 = vpop.f32.mrb[0].mxu0
        %v1903 = vadd.f32 %v1775, %v1902
        %v1904 = vpop.f32.mrb[0].mxu0
        %1905 = vmatprep.mubr.bf16.mxu0 0
        %1906 = vmatmul.mubr.bf16.gmra.mrb[0].mxu0 %v1744
        %v1907 = vpop.f32.mrb[0].mxu0
        %v1908 = vadd.f32 %v1775, %v1907
        %v1909 = vpop.f32.mrb[0].mxu0
        %v1910 = vpop.f32.mrb[0].mxu0
        %v1911 = vadd.f32 %v1775, %v1910
        %v1912 = vpop.f32.mrb[0].mxu0
        %1913 = vmatprep.mubr.bf16.mxu0 0
        %1914 = vmatmul.mubr.bf16.gmra.mrb[0].mxu0 %v1745
        %v1915 = vpop.f32.mrb[0].mxu0
        %v1916 = vadd.f32 %v1775, %v1915
        %v1917 = vpop.f32.mrb[0].mxu0
        %v1918 = vpop.f32.mrb[0].mxu0
        %v1919 = vadd.f32 %v1775, %v1918
        %v1920 = vpop.f32.mrb[0].mxu0
        %1921 = vmatprep.mubr.bf16.mxu0 0
        %1922 = vmatmul.mubr.bf16.gmra.mrb[0].mxu0 %v1746
        %v1923 = vpop.f32.mrb[0].mxu0
        %v1924 = vadd.f32 %v1775, %v1923
        %v1925 = vpop.f32.mrb[0].mxu0
        %v1926 = vpop.f32.mrb[0].mxu0
        %v1927 = vadd.f32 %v1775, %v1926
        %v1928 = vpop.f32.mrb[0].mxu0
        %1929 = vmatprep.mubr.bf16.mxu0 0
        %1930 = vmatmul.mubr.bf16.gmra.mrb[0].mxu0 %v1747
        %v1931 = vpop.f32.mrb[0].mxu0
        %v1932 = vadd.f32 %v1775, %v1931
        %v1933 = vpop.f32.mrb[0].mxu0
        %v1934 = vpop.f32.mrb[0].mxu0
        %v1935 = vadd.f32 %v1775, %v1934
        %v1936 = vpop.f32.mrb[0].mxu0
        %1937 = vmatprep.mubr.bf16.mxu0 0
        %1938 = vmatmul.mubr.bf16.gmra.mrb[0].mxu0 %v1748
        %v1939 = vpop.f32.mrb[0].mxu0
        %v1940 = vadd.f32 %v1775, %v1939
        %v1941 = vpop.f32.mrb[0].mxu0
        %v1942 = vpop.f32.mrb[0].mxu0
        %v1943 = vadd.f32 %v1775, %v1942
        %v1944 = vpop.f32.mrb[0].mxu0
        %1945 = vmatprep.mubr.bf16.mxu0 0
        %1946 = vmatmul.mubr.bf16.gmra.mrb[0].mxu0 %v1749
        %v1947 = vpop.f32.mrb[0].mxu0
        %v1948 = vadd.f32 %v1775, %v1947
        %v1949 = vpop.f32.mrb[0].mxu0
        %v1950 = vpop.f32.mrb[0].mxu0
        %v1951 = vadd.f32 %v1775, %v1950
        %v1952 = vpop.f32.mrb[0].mxu0
        %1953 = vmatprep.mubr.bf16.mxu0 0
        %1954 = vmatmul.mubr.bf16.gmra.mrb[0].mxu0 %v1750
        %v1955 = vpop.f32.mrb[0].mxu0
        %v1956 = vadd.f32 %v1775, %v1955
        %v1957 = vpop.f32.mrb[0].mxu0
        %v1958 = vpop.f32.mrb[0].mxu0
        %v1959 = vadd.f32 %v1775, %v1958
        %v1960 = vpop.f32.mrb[0].mxu0
        %1961 = vmatprep.mubr.bf16.mxu0 0
        %1962 = vmatmul.mubr.bf16.gmra.mrb[0].mxu0 %v1751
        %v1963 = vpop.f32.mrb[0].mxu0
        %v1964 = vadd.f32 %v1775, %v1963
        %v1965 = vpop.f32.mrb[0].mxu0
        %v1966 = vpop.f32.mrb[0].mxu0
        %v1967 = vadd.f32 %v1775, %v1966
        %v1968 = vpop.f32.mrb[0].mxu0
        %1969 = vmatprep.mubr.bf16.mxu0 0
        %1970 = vmatmul.mubr.bf16.gmra.mrb[0].mxu0 %v1752
        %v1971 = vpop.f32.mrb[0].mxu0
        %v1972 = vadd.f32 %v1775, %v1971
        %v1973 = vpop.f32.mrb[0].mxu0
        %v1974 = vpop.f32.mrb[0].mxu0
        %v1975 = vadd.f32 %v1775, %v1974
        %v1976 = vpop.f32.mrb[0].mxu0
        %1977 = vmatprep.mubr.bf16.mxu0 0
        %1978 = vmatmul.mubr.bf16.gmra.mrb[0].mxu0 %v1753
        %v1979 = vpop.f32.mrb[0].mxu0
        %v1980 = vadd.f32 %v1775, %v1979
        %v1981 = vpop.f32.mrb[0].mxu0
        %v1982 = vpop.f32.mrb[0].mxu0
        %v1983 = vadd.f32 %v1775, %v1982
        %v1984 = vpop.f32.mrb[0].mxu0
        %1985 = vdwg.mxu0
        %v1986 = vunpack.c.l.bf16 %v342
        %v1987 = vunpack.c.l.bf16 %v343
        %v1988 = vunpack.c.l.bf16 %v344
        %v1989 = vunpack.c.l.bf16 %v345
        %v1990 = vunpack.c.l.bf16 %v346
        %v1991 = vunpack.c.l.bf16 %v347
        %v1992 = vunpack.c.l.bf16 %v348
        %v1993 = vunpack.c.l.bf16 %v349
        %v1994 = vunpack.c.l.bf16 %v350
        %v1995 = vunpack.c.l.bf16 %v351
        %v1996 = vunpack.c.l.bf16 %v352
        %v1997 = vunpack.c.l.bf16 %v353
        %v1998 = vunpack.c.l.bf16 %v354
        %v1999 = vunpack.c.l.bf16 %v355
        %v2000 = vunpack.c.l.bf16 %v356
        %v2001 = vunpack.c.l.bf16 %v357
        %v2002 = vunpack.c.l.bf16 %v358
        %v2003 = vunpack.c.l.bf16 %v359
        %v2004 = vunpack.c.l.bf16 %v360
        %v2005 = vunpack.c.l.bf16 %v361
        %v2006 = vunpack.c.l.bf16 %v362
        %v2007 = vunpack.c.l.bf16 %v363
        %v2008 = vunpack.c.l.bf16 %v364
        %v2009 = vunpack.c.l.bf16 %v365
        %v2010 = vunpack.c.l.bf16 %v366
        %v2011 = vunpack.c.l.bf16 %v367
        %v2012 = vunpack.c.l.bf16 %v368
        %v2013 = vunpack.c.l.bf16 %v369
        %v2014 = vunpack.c.l.bf16 %v370
        %v2015 = vunpack.c.l.bf16 %v371
        %v2016 = vunpack.c.l.bf16 %v372
        %v2017 = vunpack.c.l.bf16 %v373
        %v2018 = vadd.f32 %v1860, %v1986
        %v2019 = vadd.f32 %v1863, %v1987
        %v2020 = vadd.f32 %v1868, %v1988
        %v2021 = vadd.f32 %v1871, %v1989
        %v2022 = vadd.f32 %v1876, %v1990
        %v2023 = vadd.f32 %v1879, %v1991
        %v2024 = vadd.f32 %v1884, %v1992
        %v2025 = vadd.f32 %v1887, %v1993
        %v2026 = vadd.f32 %v1892, %v1994
        %v2027 = vadd.f32 %v1895, %v1995
        %v2028 = vadd.f32 %v1900, %v1996
        %v2029 = vadd.f32 %v1903, %v1997
        %v2030 = vadd.f32 %v1908, %v1998
        %v2031 = vadd.f32 %v1911, %v1999
        %v2032 = vadd.f32 %v1916, %v2000
        %v2033 = vadd.f32 %v1919, %v2001
        %v2034 = vadd.f32 %v1924, %v2002
        %v2035 = vadd.f32 %v1927, %v2003
        %v2036 = vadd.f32 %v1932, %v2004
        %v2037 = vadd.f32 %v1935, %v2005
        %v2038 = vadd.f32 %v1940, %v2006
        %v2039 = vadd.f32 %v1943, %v2007
        %v2040 = vadd.f32 %v1948, %v2008
        %v2041 = vadd.f32 %v1951, %v2009
        %v2042 = vadd.f32 %v1956, %v2010
        %v2043 = vadd.f32 %v1959, %v2011
        %v2044 = vadd.f32 %v1964, %v2012
        %v2045 = vadd.f32 %v1967, %v2013
        %v2046 = vadd.f32 %v1972, %v2014
        %v2047 = vadd.f32 %v1975, %v2015
        %v2048 = vadd.f32 %v1980, %v2016
        %v2049 = vadd.f32 %v1983, %v2017
        %2050 = vst [vmem:[%s340] sm:$0xff] %v2018
        %2051 = vst [vmem:[%s340 + $0x8] sm:$0xff] %v2019
        %2052 = vst [vmem:[%s340 + $0x10] sm:$0xff] %v2020
        %2053 = vst [vmem:[%s340 + $0x18] sm:$0xff] %v2021
        %2054 = vst [vmem:[%s340 + $0x20] sm:$0xff] %v2022
        %2055 = vst [vmem:[%s340 + $0x28] sm:$0xff] %v2023
        %2056 = vst [vmem:[%s340 + $0x30] sm:$0xff] %v2024
        %2057 = vst [vmem:[%s340 + $0x38] sm:$0xff] %v2025
        %2058 = vst [vmem:[%s340 + $0x40] sm:$0xff] %v2026
        %2059 = vst [vmem:[%s340 + $0x48] sm:$0xff] %v2027
        %2060 = vst [vmem:[%s340 + $0x50] sm:$0xff] %v2028
        %2061 = vst [vmem:[%s340 + $0x58] sm:$0xff] %v2029
        %2062 = vst [vmem:[%s340 + $0x60] sm:$0xff] %v2030
        %2063 = vst [vmem:[%s340 + $0x68] sm:$0xff] %v2031
        %2064 = vst [vmem:[%s340 + $0x70] sm:$0xff] %v2032
        %2065 = vst [vmem:[%s340 + $0x78] sm:$0xff] %v2033
        %2066 = vst [vmem:[%s340 + $0x80] sm:$0xff] %v2034
        %2067 = vst [vmem:[%s340 + $0x88] sm:$0xff] %v2035
        %2068 = vst [vmem:[%s340 + $0x90] sm:$0xff] %v2036
        %2069 = vst [vmem:[%s340 + $0x98] sm:$0xff] %v2037
        %2070 = vst [vmem:[%s340 + $0xa0] sm:$0xff] %v2038
        %2071 = vst [vmem:[%s340 + $0xa8] sm:$0xff] %v2039
        %2072 = vst [vmem:[%s340 + $0xb0] sm:$0xff] %v2040
        %2073 = vst [vmem:[%s340 + $0xb8] sm:$0xff] %v2041
        %2074 = vst [vmem:[%s340 + $0xc0] sm:$0xff] %v2042
        %2075 = vst [vmem:[%s340 + $0xc8] sm:$0xff] %v2043
        %2076 = vst [vmem:[%s340 + $0xd0] sm:$0xff] %v2044
        %2077 = vst [vmem:[%s340 + $0xd8] sm:$0xff] %v2045
        %2078 = vst [vmem:[%s340 + $0xe0] sm:$0xff] %v2046
        %2079 = vst [vmem:[%s340 + $0xe8] sm:$0xff] %v2047
        %2080 = vst [vmem:[%s340 + $0xf0] sm:$0xff] %v2048
        %2081 = vst [vmem:[%s340 + $0xf8] sm:$0xff] %v2049
        %s2082 = sand.u32 %s186, 1
        %s2083 = scalar_lea.sflag [#allocation4], %s2082
        %s2084 = sand.u32 %s186, 1
        %s2085 = smul.addr %s2084, 256
        %s2086 = scalar_lea.vmem [#allocation10], %s2085
        // Predicated region
        $region65: #{tpu_custom_call.1} parent=47 // pred_check
          %p2087 = pneg %p196
        $region66: #{tpu_custom_call.1} parent=47 // pred_check_branch
          %2089 = sbr.rel (%p2087) target = $region68
        $region67: #{tpu_custom_call.1} parent=47 // pred_region
          %s2091 = ssub.s32 4096, 4096
          %2092 = vsyncadd %s2083, %s2091
          %s2093 = smul.addr %s26, 32
          %s2094 = smul.addr %s2093, 128
          %s2095 = scalar_lea.hbm %s7, %s2094
          %s2096 = sshll.u32 %s2086, 4
          %s2097 = int_to_ptr.vmem [resolvable:$true] %s2096
          %2102 = dma.vmem_to_hbm [thread:$0]  %s2097, 4096, %s2095, %s2083, 128, 128, 8
        $region68: #{tpu_custom_call.1} parent=47 // pred_fallthru
          _
      $region48: #{tpu_custom_call.1} parent=5 // pred_fallthru
        _
      %p2103 = scmp.le.s32.totalorder 2, %s21
      // Predicated region
      $region69: #{tpu_custom_call.1} parent=5 // pred_check
        %p2104 = pneg %p2103
      $region70: #{tpu_custom_call.1} parent=5 // pred_check_branch
        %2106 = sbr.rel (%p2104) target = $region72
      $region71: #{tpu_custom_call.1} parent=5 // pred_region
        %s2107 = ssub.s32 %s21, 2
        // Predicated region
        $region73: #{tpu_custom_call.1} parent=71 // pred_check
          %p2108 = pneg %p202
        $region74: #{tpu_custom_call.1} parent=71 // pred_check_branch
          %2110 = sbr.rel (%p2108) target = $region76
        $region75: #{tpu_custom_call.1} parent=71 // pred_region
          %s2111 = sand.u32 %s187, 1
          %s2112 = scalar_lea.sflag [#allocation4], %s2111
          %s2113 = sand.u32 %s187, 1
          %s2114 = smul.addr %s2113, 256
          %s2115 = scalar_lea.vmem [#allocation10], %s2114
          %2116 = dma.done %s2112, 4096
        $region76: #{tpu_custom_call.1} parent=71 // pred_fallthru
          _
      $region72: #{tpu_custom_call.1} parent=5 // pred_fallthru
        _
    $region6: #{tpu_custom_call.1} parent=1 // loop_footer
      %s25 = sadd.s32 1, %s21
    $region7: #{tpu_custom_call.1} parent=1 // loop_footer_branch
      %20 = sbr.rel target = $region3
    $region8: #{tpu_custom_call.1} parent=1 // loop_exit
      _
    %2117 = vsyncpa [#allocation3], 1
    %s2118 = scalar_lea.sflag [#allocation3], 1
    %2119 = vsyncpa %s2118, 1
    %2120 = vsyncpa [#allocation6], 1
    %2121 = vsyncpa [#allocation9], 1
    %2122 = vsyncpa [#allocation4], 1
    %s2123 = scalar_lea.sflag [#allocation4], 1
    %2124 = vsyncpa %s2123, 1

</llo_original>
